<compile_context>
chip_gen: v5e
topology: v5e:2x2
jax: 0.10.0
libtpu: 0.0.40
codegen_flags: <defaults>
</compile_context>

<pallas_src>
import jax
import jax.numpy as jnp
from jax.experimental import pallas as pl
from jax.experimental.pallas import tpu as pltpu

ROI = 56      # roi_align output size
COEFF = 14    # coefficient spatial size
SPATIAL_SCALE = 0.25


# ----------------------------------------------------------------------------
# Weight-matrix builders (plain-JAX glue; data-dependent index/weight setup).
# TODO(synk): the gather-style bilinear sampling-index generation (roi_align
# grid, F.interpolate, grid_sample grid) has no clean Pallas equivalent; only
# the separable weight matrices are built here, the resampling math (matmuls)
# runs in-kernel.
# ----------------------------------------------------------------------------
def _upsample_matrix(in_size: int, out_size: int) -> jnp.ndarray:
    """F.interpolate(..., mode='bilinear', align_corners=False) as (out,in)."""
    scale = in_size / out_size
    dst = jnp.arange(out_size, dtype=jnp.float32)
    src = jnp.maximum((dst + 0.5) * scale - 0.5, 0.0)
    low = jnp.minimum(jnp.floor(src), in_size - 1)
    high = jnp.minimum(low + 1.0, in_size - 1)
    lam = src - low
    idx = jnp.arange(in_size, dtype=jnp.float32)[None, :]
    w = ((1.0 - lam)[:, None] * (idx == low[:, None]).astype(jnp.float32)
         + lam[:, None] * (idx == high[:, None]).astype(jnp.float32))
    return w


def _roi_align_matrix(c0, c1, in_size: int, out_size: int, spatial_scale: float):
    """torchvision roi_align (aligned=True, sampling_ratio=1), 1-D weights (out,in)."""
    start = c0 * spatial_scale - 0.5
    end = c1 * spatial_scale - 0.5
    bin_size = (end - start) / out_size
    centers = start + (jnp.arange(out_size, dtype=jnp.float32) + 0.5) * bin_size
    valid = ((centers >= -1.0) & (centers <= in_size)).astype(jnp.float32)
    c = jnp.maximum(centers, 0.0)
    low = jnp.minimum(jnp.floor(c), in_size - 1)
    at_edge = low >= in_size - 1
    c = jnp.where(at_edge, low, c)
    high = jnp.where(at_edge, low, low + 1.0)
    lam = c - low
    idx = jnp.arange(in_size, dtype=jnp.float32)[None, :]
    w = ((1.0 - lam)[:, None] * (idx == low[:, None]).astype(jnp.float32)
         + lam[:, None] * (idx == high[:, None]).astype(jnp.float32))
    return w * valid[:, None]


def _paste_matrix(c0, c1, out_size: int, in_size: int):
    """do_paste_mask / F.grid_sample (align_corners=False, zero pad), (out,in)."""
    # NOTE: a degenerate box (c1 == c0) yields inf/NaN weights, matching the
    # PyTorch reference behavior.
    pix = jnp.arange(out_size, dtype=jnp.float32) + 0.5
    g = (pix - c0) / (c1 - c0) * 2.0 - 1.0
    x = (g + 1.0) * in_size / 2.0 - 0.5
    low = jnp.floor(x)
    high = low + 1.0
    lam = x - low
    idx = jnp.arange(in_size, dtype=jnp.float32)[None, :]
    w = ((1.0 - lam)[:, None] * (idx == low[:, None]).astype(jnp.float32)
         + lam[:, None] * (idx == high[:, None]).astype(jnp.float32))
    return w  # out-of-bounds rows are all-zero == zero padding


# ----------------------------------------------------------------------------
# Pallas kernel: one grid step per PAIR of ROIs; all static sizes derived from
# the ref shapes (no partial/closure parameters needed).
# ----------------------------------------------------------------------------
def _blender_kernel(batch_idx_ref, bases_ref, ry_ref, rxt_ref, logits_ref,
                    gy_ref, gxt_ref, out_ref):
    nroi = ry_ref.shape[0]                      # ROIs per grid step (R)
    nb = logits_ref.shape[2] // ROI             # number of bases
    b_h = bases_ref.shape[1] // nb
    img_w = gxt_ref.shape[2]
    pack_lanes = out_ref.ndim == 2              # pair packed along lane axis
    i = pl.program_id(0)

    for r in range(nroi):                       # static unroll over the ROI pair
        # per-ROI batch-image selection (dynamic index into resident bases)
        bsel = batch_idx_ref[nroi * i + r]
        bases_sel = bases_ref[bsel]             # (nb*b_h, b_w) bf16
        ry_r = ry_ref[r]                        # (56, b_h)      bf16
        rxt_r = rxt_ref[r]                      # (b_w, 56)      bf16

        # --- roi_align as two MXU matmuls, exact FLOPs, no zero-padded operand
        s = jnp.dot(bases_sel, rxt_r,
                    preferred_element_type=jnp.float32)          # (nb*b_h, 56)
        s_wide = jnp.concatenate(
            [s[b * b_h:(b + 1) * b_h, :].astype(jnp.bfloat16) for b in range(nb)],
            axis=1)                                              # (b_h, nb*56)
        rois = jnp.dot(ry_r, s_wide,
                       preferred_element_type=jnp.float32)       # (56, nb*56)

        # --- softmax over bases + blend + sigmoid (f32 on VPU/EUP) ---
        l = logits_ref[r]                                        # (56, nb*56) f32
        m = l[:, 0:ROI]
        for b in range(1, nb):
            m = jnp.maximum(m, l[:, b * ROI:(b + 1) * ROI])
        num = jnp.zeros((ROI, ROI), jnp.float32)
        den = jnp.zeros((ROI, ROI), jnp.float32)
        for b in range(nb):
            e = jnp.exp(l[:, b * ROI:(b + 1) * ROI] - m)
            den = den + e
            num = num + rois[:, b * ROI:(b + 1) * ROI] * e
        mask = jax.nn.sigmoid(num * pl.reciprocal(den, approx=True))   # (56, 56)

        # --- paste (grid_sample): both matmuls lane-dense with N = img_w ---
        t = jnp.dot(mask.astype(jnp.bfloat16), gxt_ref[r],
                    preferred_element_type=jnp.float32)          # (56, img_w)
        o = jnp.dot(gy_ref[r], t.astype(jnp.bfloat16),
                    preferred_element_type=jnp.float32)          # (img_h, img_w)

        if pack_lanes:
            # small-image path: two ROIs side by side -> lane-dense store
            out_ref[:, r * img_w:(r + 1) * img_w] = o.astype(out_ref.dtype)
        else:
            out_ref[r] = o.astype(out_ref.dtype)


# ----------------------------------------------------------------------------
# Wrapper
# ----------------------------------------------------------------------------
@jax.jit
def blender_forward(bases, box_feat):
    """Returns the pasted per-ROI masks in bfloat16 (values in [0, 1])."""
    batch, num_bases, b_h, b_w = bases.shape
    n = box_feat.shape[0]
    img_h, img_w = b_h * 4, b_w * 4
    bf16 = jnp.bfloat16
    R = 2                        # ROIs per grid step (perf review: v6e/v7x)

    box_pred = box_feat[:, :5]
    top_feat = box_feat[:, 5:]
    batch_idx = box_pred[:, 0].astype(jnp.int32)
    x0, y0, x1, y1 = box_pred[:, 1], box_pred[:, 2], box_pred[:, 3], box_pred[:, 4]

    # separable resampling weight matrices (index/weight glue)
    ry = jax.vmap(lambda a, b: _roi_align_matrix(a, b, b_h, ROI, SPATIAL_SCALE))(y0, y1)
    rx = jax.vmap(lambda a, b: _roi_align_matrix(a, b, b_w, ROI, SPATIAL_SCALE))(x0, x1)
    gy = jax.vmap(lambda a, b: _paste_matrix(a, b, img_h, ROI))(y0, y1)
    gx = jax.vmap(lambda a, b: _paste_matrix(a, b, img_w, ROI))(x0, x1)
    u = _upsample_matrix(COEFF, ROI)

    # 14->56 coefficient upsample hoisted to one batched einsum; HIGHEST
    # precision so the in-kernel softmax sees accurate logits (review note).
    c14 = top_feat.reshape(n, num_bases, COEFF, COEFF)
    logits = jnp.einsum('pi,nbij,qj->npbq', u, c14, u,
                        precision=jax.lax.Precision.HIGHEST)
    logits = logits.reshape(n, ROI, num_bases * ROI).astype(jnp.float32)

    # bases packed (batch, B*b_h, b_w): rows grouped by base (pure reshape)
    bases_packed = bases.reshape(batch, num_bases * b_h, b_w).astype(bf16)
    ry_b = ry.astype(bf16)                                   # (n, 56, b_h)
    rxt_b = jnp.transpose(rx, (0, 2, 1)).astype(bf16)        # (n, b_w, 56) dense
    gy_b = gy.astype(bf16)                                   # (n, img_h, 56)
    gxt_b = jnp.transpose(gx, (0, 2, 1)).astype(bf16)        # (n, 56, img_w)

    # pad ROI count to a multiple of R (padded entries select batch 0, all-zero
    # weights -> harmless; sliced off below)
    n_pad = ((n + R - 1) // R) * R
    if n_pad != n:
        p = n_pad - n
        pad = lambda a: jnp.pad(a, ((0, p),) + ((0, 0),) * (a.ndim - 1))
        batch_idx, ry_b, rxt_b, logits, gy_b, gxt_b = map(
            pad, (batch_idx, ry_b, rxt_b, logits, gy_b, gxt_b))

    pack_lanes = img_w < 128     # lane-dense output stores for small images
    if pack_lanes:
        out_shape = jax.ShapeDtypeStruct((n_pad // R, img_h, R * img_w), bf16)
        out_spec = pl.BlockSpec((None, img_h, R * img_w), lambda i, bidx: (i, 0, 0))
    else:
        out_shape = jax.ShapeDtypeStruct((n_pad, img_h, img_w), bf16)
        out_spec = pl.BlockSpec((R, img_h, img_w), lambda i, bidx: (i, 0, 0))

    grid_spec = pltpu.PrefetchScalarGridSpec(
        num_scalar_prefetch=1,
        grid=(n_pad // R,),
        in_specs=[
            # bases: full array resident in VMEM, DMA'd once (constant index)
            pl.BlockSpec((batch, num_bases * b_h, b_w), lambda i, bidx: (0, 0, 0)),
            pl.BlockSpec((R, ROI, b_h), lambda i, bidx: (i, 0, 0)),
            pl.BlockSpec((R, b_w, ROI), lambda i, bidx: (i, 0, 0)),
            pl.BlockSpec((R, ROI, num_bases * ROI), lambda i, bidx: (i, 0, 0)),
            pl.BlockSpec((R, img_h, ROI), lambda i, bidx: (i, 0, 0)),
            pl.BlockSpec((R, ROI, img_w), lambda i, bidx: (i, 0, 0)),
        ],
        out_specs=out_spec,
    )

    out = pl.pallas_call(
        _blender_kernel,
        out_shape=out_shape,
        grid_spec=grid_spec,
        compiler_params=pltpu.CompilerParams(
            dimension_semantics=("parallel",),        # independent ROI pairs
            vmem_limit_bytes=32 * 1024 * 1024,        # right-sized for v7x's 64 MiB
        ),
    )(batch_idx, bases_packed, ry_b, rxt_b, logits, gy_b, gxt_b)

    if pack_lanes:
        out = out.reshape(n_pad // R, img_h, R, img_w)
        out = jnp.transpose(out, (0, 2, 1, 3)).reshape(n_pad, img_h, img_w)
    return out[:n]


# ----------------------------------------------------------------------------
# Pure-JAX reference (same math, dense f32 einsums) for a sanity check.
# ----------------------------------------------------------------------------
def blender_reference(bases, box_feat):
    batch, num_bases, b_h, b_w = bases.shape
    n = box_feat.shape[0]
    img_h, img_w = b_h * 4, b_w * 4
    box_pred = box_feat[:, :5]
    top_feat = box_feat[:, 5:]
    bidx = box_pred[:, 0].astype(jnp.int32)
    x0, y0, x1, y1 = box_pred[:, 1], box_pred[:, 2], box_pred[:, 3], box_pred[:, 4]

    ry = jax.vmap(lambda a, b: _roi_align_matrix(a, b, b_h, ROI, SPATIAL_SCALE))(y0, y1)
    rx = jax.vmap(lambda a, b: _roi_align_matrix(a, b, b_w, ROI, SPATIAL_SCALE))(x0, x1)
    gy = jax.vmap(lambda a, b: _paste_matrix(a, b, img_h, ROI))(y0, y1)
    gx = jax.vmap(lambda a, b: _paste_matrix(a, b, img_w, ROI))(x0, x1)
    u = _upsample_matrix(COEFF, ROI)
    c14 = top_feat.reshape(n, num_bases, COEFF, COEFF)

    hi = jax.lax.Precision.HIGHEST
    sel = bases[bidx]
    rois = jnp.einsum('nph,nbhw,nqw->nbpq', ry, sel, rx, precision=hi)
    c56 = jnp.einsum('pi,nbij,qj->nbpq', u, c14, u, precision=hi)
    sm = jax.nn.softmax(c56, axis=1)
    m = jax.nn.sigmoid(jnp.sum(rois * sm, axis=1))
    return jnp.einsum('nhp,npq,nwq->nhw', gy, m, gx, precision=hi)


if __name__ == "__main__":
    key = jax.random.PRNGKey(0)
    k1, k2 = jax.random.split(key)

    batch, num_bases, b_h, b_w = 2, 4, 16, 16     # image = 64 x 64
    n_boxes = 2
    bases = jax.random.normal(k1, (batch, num_bases, b_h, b_w), dtype=jnp.float32)
    # rows: [batch_idx, x0, y0, x1, y1] in image (64x64) coordinates
    boxes = jnp.array([[1.0, 10.0, 2.0, 60.0, 30.0],
                       [0.0, 4.0, 6.0, 40.0, 50.0]], dtype=jnp.float32)
    coeffs = 0.5 * jax.random.normal(
        k2, (n_boxes, num_bases * COEFF * COEFF), dtype=jnp.float32)
    box_feat = jnp.concatenate([boxes, coeffs], axis=1)   # (2, 789)

    out = blender_forward(bases, box_feat)
    out = jax.block_until_ready(out)

    assert out.shape == (n_boxes, b_h * 4, b_w * 4)
    ref = blender_reference(bases, box_feat)
    max_err = float(jnp.max(jnp.abs(out.astype(jnp.float32) - ref)))
    # bf16 matmul operands / bf16 output (f32 accumulate) vs f32-HIGHEST ref
    assert max_err < 5e-2, f"max abs error {max_err}"

    print("KERNEL_OK")
</pallas_src>

<mosaic_0001>
module attributes {stable_mosaic.version = 11 : i64} {
  func.func @_blender_kernel(%arg0: i32, %arg1: memref<2xi32, #tpu.memory_space<smem>>, %arg2: memref<2x64x16xbf16, #tpu.memory_space<vmem>>, %arg3: memref<2x56x16xbf16, #tpu.memory_space<vmem>>, %arg4: memref<2x16x56xbf16, #tpu.memory_space<vmem>>, %arg5: memref<2x56x224xf32, #tpu.memory_space<vmem>>, %arg6: memref<2x64x56xbf16, #tpu.memory_space<vmem>>, %arg7: memref<2x56x64xbf16, #tpu.memory_space<vmem>>, %arg8: memref<1x64x128xbf16, #tpu.memory_space<vmem>>) attributes {dimension_semantics = [#tpu.dimension_semantics<parallel>], iteration_bounds = array<i64: 1>, scalar_prefetch = 1 : i64, scratch_operands = 0 : i64, tpu.core_type = #tpu.core_type<tc>, window_params = [{pipeline_mode = #tpu.pipeline_mode<synchronous>, transform_indices = @transform_0, window_bounds = array<i64: 2, 64, 16>}, {transform_indices = @transform_1, window_bounds = array<i64: 2, 56, 16>}, {transform_indices = @transform_2, window_bounds = array<i64: 2, 16, 56>}, {transform_indices = @transform_3, window_bounds = array<i64: 2, 56, 224>}, {transform_indices = @transform_4, window_bounds = array<i64: 2, 64, 56>}, {transform_indices = @transform_5, window_bounds = array<i64: 2, 56, 64>}, {transform_indices = @transform_6, window_bounds = array<i64: 1, 64, 128>}]} {
    %c2_i32 = arith.constant 2 : i32
    %0 = arith.muli %c2_i32, %arg0 : i32
    %c0_i32 = arith.constant 0 : i32
    %1 = arith.addi %0, %c0_i32 : i32
    %2 = arith.index_cast %1 : i32 to index
    %3 = memref.load %arg1[%2] : memref<2xi32, #tpu.memory_space<smem>>
    %4 = arith.index_cast %3 : i32 to index
    %c0 = arith.constant 0 : index
    %c0_0 = arith.constant 0 : index
    %5 = vector.load %arg2[%4, %c0, %c0_0] : memref<2x64x16xbf16, #tpu.memory_space<vmem>>, vector<1x64x16xbf16>
    %6 = vector.shape_cast %5 : vector<1x64x16xbf16> to vector<64x16xbf16>
    %c0_1 = arith.constant 0 : index
    %c0_2 = arith.constant 0 : index
    %c0_3 = arith.constant 0 : index
    %7 = vector.load %arg3[%c0_1, %c0_2, %c0_3] : memref<2x56x16xbf16, #tpu.memory_space<vmem>>, vector<1x56x16xbf16>
    %8 = vector.shape_cast %7 : vector<1x56x16xbf16> to vector<56x16xbf16>
    %c0_4 = arith.constant 0 : index
    %c0_5 = arith.constant 0 : index
    %c0_6 = arith.constant 0 : index
    %9 = vector.load %arg4[%c0_4, %c0_5, %c0_6] : memref<2x16x56xbf16, #tpu.memory_space<vmem>>, vector<1x16x56xbf16>
    %10 = vector.shape_cast %9 : vector<1x16x56xbf16> to vector<16x56xbf16>
    %cst = arith.constant dense<0.000000e+00> : vector<64x56xf32>
    %11 = tpu.matmul %6, %10, %cst {dimension_numbers = #tpu.dot_dimension_numbers<[1], [0], [0], [1], [0, 0, 1, 1], [], []>} : vector<64x16xbf16>, vector<16x56xbf16>, vector<64x56xf32> -> vector<64x56xf32>
    %12 = vector.extract_strided_slice %11 {offsets = [0, 0], sizes = [16, 56], strides = [1, 1]} : vector<64x56xf32> to vector<16x56xf32>
    %13 = arith.truncf %12 : vector<16x56xf32> to vector<16x56xbf16>
    %14 = vector.extract_strided_slice %11 {offsets = [16, 0], sizes = [16, 56], strides = [1, 1]} : vector<64x56xf32> to vector<16x56xf32>
    %15 = arith.truncf %14 : vector<16x56xf32> to vector<16x56xbf16>
    %16 = vector.extract_strided_slice %11 {offsets = [32, 0], sizes = [16, 56], strides = [1, 1]} : vector<64x56xf32> to vector<16x56xf32>
    %17 = arith.truncf %16 : vector<16x56xf32> to vector<16x56xbf16>
    %18 = vector.extract_strided_slice %11 {offsets = [48, 0], sizes = [16, 56], strides = [1, 1]} : vector<64x56xf32> to vector<16x56xf32>
    %19 = arith.truncf %18 : vector<16x56xf32> to vector<16x56xbf16>
    %20 = tpu.concatenate %13, %15, %17, %19 in 1 : vector<16x56xbf16>, vector<16x56xbf16>, vector<16x56xbf16>, vector<16x56xbf16> -> vector<16x224xbf16>
    %cst_7 = arith.constant dense<0.000000e+00> : vector<56x224xf32>
    %21 = tpu.matmul %8, %20, %cst_7 {dimension_numbers = #tpu.dot_dimension_numbers<[1], [0], [0], [1], [0, 0, 1, 1], [], []>} : vector<56x16xbf16>, vector<16x224xbf16>, vector<56x224xf32> -> vector<56x224xf32>
    %c0_8 = arith.constant 0 : index
    %c0_9 = arith.constant 0 : index
    %c0_10 = arith.constant 0 : index
    %22 = vector.load %arg5[%c0_8, %c0_9, %c0_10] : memref<2x56x224xf32, #tpu.memory_space<vmem>>, vector<1x56x224xf32>
    %23 = vector.shape_cast %22 : vector<1x56x224xf32> to vector<56x224xf32>
    %24 = vector.extract_strided_slice %23 {offsets = [0, 0], sizes = [56, 56], strides = [1, 1]} : vector<56x224xf32> to vector<56x56xf32>
    %25 = vector.extract_strided_slice %23 {offsets = [0, 56], sizes = [56, 56], strides = [1, 1]} : vector<56x224xf32> to vector<56x56xf32>
    %26 = arith.maximumf %24, %25 : vector<56x56xf32>
    %27 = vector.extract_strided_slice %23 {offsets = [0, 112], sizes = [56, 56], strides = [1, 1]} : vector<56x224xf32> to vector<56x56xf32>
    %28 = arith.maximumf %26, %27 : vector<56x56xf32>
    %29 = vector.extract_strided_slice %23 {offsets = [0, 168], sizes = [56, 56], strides = [1, 1]} : vector<56x224xf32> to vector<56x56xf32>
    %30 = arith.maximumf %28, %29 : vector<56x56xf32>
    %cst_11 = arith.constant 0.000000e+00 : f32
    %31 = vector.broadcast %cst_11 : f32 to vector<56x56xf32>
    %cst_12 = arith.constant 0.000000e+00 : f32
    %32 = vector.broadcast %cst_12 : f32 to vector<56x56xf32>
    %33 = vector.extract_strided_slice %23 {offsets = [0, 0], sizes = [56, 56], strides = [1, 1]} : vector<56x224xf32> to vector<56x56xf32>
    %34 = arith.subf %33, %30 : vector<56x56xf32>
    %35 = math.exp %34 : vector<56x56xf32>
    %36 = arith.addf %32, %35 : vector<56x56xf32>
    %37 = vector.extract_strided_slice %21 {offsets = [0, 0], sizes = [56, 56], strides = [1, 1]} : vector<56x224xf32> to vector<56x56xf32>
    %38 = arith.mulf %37, %35 : vector<56x56xf32>
    %39 = arith.addf %31, %38 : vector<56x56xf32>
    %40 = vector.extract_strided_slice %23 {offsets = [0, 56], sizes = [56, 56], strides = [1, 1]} : vector<56x224xf32> to vector<56x56xf32>
    %41 = arith.subf %40, %30 : vector<56x56xf32>
    %42 = math.exp %41 : vector<56x56xf32>
    %43 = arith.addf %36, %42 : vector<56x56xf32>
    %44 = vector.extract_strided_slice %21 {offsets = [0, 56], sizes = [56, 56], strides = [1, 1]} : vector<56x224xf32> to vector<56x56xf32>
    %45 = arith.mulf %44, %42 : vector<56x56xf32>
    %46 = arith.addf %39, %45 : vector<56x56xf32>
    %47 = vector.extract_strided_slice %23 {offsets = [0, 112], sizes = [56, 56], strides = [1, 1]} : vector<56x224xf32> to vector<56x56xf32>
    %48 = arith.subf %47, %30 : vector<56x56xf32>
    %49 = math.exp %48 : vector<56x56xf32>
    %50 = arith.addf %43, %49 : vector<56x56xf32>
    %51 = vector.extract_strided_slice %21 {offsets = [0, 112], sizes = [56, 56], strides = [1, 1]} : vector<56x224xf32> to vector<56x56xf32>
    %52 = arith.mulf %51, %49 : vector<56x56xf32>
    %53 = arith.addf %46, %52 : vector<56x56xf32>
    %54 = vector.extract_strided_slice %23 {offsets = [0, 168], sizes = [56, 56], strides = [1, 1]} : vector<56x224xf32> to vector<56x56xf32>
    %55 = arith.subf %54, %30 : vector<56x56xf32>
    %56 = math.exp %55 : vector<56x56xf32>
    %57 = arith.addf %50, %56 : vector<56x56xf32>
    %58 = vector.extract_strided_slice %21 {offsets = [0, 168], sizes = [56, 56], strides = [1, 1]} : vector<56x224xf32> to vector<56x56xf32>
    %59 = arith.mulf %58, %56 : vector<56x56xf32>
    %60 = arith.addf %53, %59 : vector<56x56xf32>
    %61 = tpu.reciprocal %57 {approx = true} : vector<56x56xf32> -> vector<56x56xf32>
    %62 = arith.mulf %60, %61 : vector<56x56xf32>
    %63 = arith.negf %62 : vector<56x56xf32>
    %64 = math.exp %63 : vector<56x56xf32>
    %cst_13 = arith.constant 1.000000e+00 : f32
    %65 = vector.broadcast %cst_13 : f32 to vector<56x56xf32>
    %66 = arith.addf %65, %64 : vector<56x56xf32>
    %67 = arith.divf %65, %66 : vector<56x56xf32>
    %68 = arith.truncf %67 : vector<56x56xf32> to vector<56x56xbf16>
    %c0_14 = arith.constant 0 : index
    %c0_15 = arith.constant 0 : index
    %c0_16 = arith.constant 0 : index
    %69 = vector.load %arg7[%c0_14, %c0_15, %c0_16] : memref<2x56x64xbf16, #tpu.memory_space<vmem>>, vector<1x56x64xbf16>
    %70 = vector.shape_cast %69 : vector<1x56x64xbf16> to vector<56x64xbf16>
    %cst_17 = arith.constant dense<0.000000e+00> : vector<56x64xf32>
    %71 = tpu.matmul %68, %70, %cst_17 {dimension_numbers = #tpu.dot_dimension_numbers<[1], [0], [0], [1], [0, 0, 1, 1], [], []>} : vector<56x56xbf16>, vector<56x64xbf16>, vector<56x64xf32> -> vector<56x64xf32>
    %c0_18 = arith.constant 0 : index
    %c0_19 = arith.constant 0 : index
    %c0_20 = arith.constant 0 : index
    %72 = vector.load %arg6[%c0_18, %c0_19, %c0_20] : memref<2x64x56xbf16, #tpu.memory_space<vmem>>, vector<1x64x56xbf16>
    %73 = vector.shape_cast %72 : vector<1x64x56xbf16> to vector<64x56xbf16>
    %74 = arith.truncf %71 : vector<56x64xf32> to vector<56x64xbf16>
    %cst_21 = arith.constant dense<0.000000e+00> : vector<64x64xf32>
    %75 = tpu.matmul %73, %74, %cst_21 {dimension_numbers = #tpu.dot_dimension_numbers<[1], [0], [0], [1], [0, 0, 1, 1], [], []>} : vector<64x56xbf16>, vector<56x64xbf16>, vector<64x64xf32> -> vector<64x64xf32>
    %76 = arith.truncf %75 : vector<64x64xf32> to vector<64x64xbf16>
    %c0_22 = arith.constant 0 : index
    %c0_23 = arith.constant 0 : index
    %c0_24 = arith.constant 0 : index
    %77 = vector.load %arg8[%c0_22, %c0_23, %c0_24] : memref<1x64x128xbf16, #tpu.memory_space<vmem>>, vector<1x64x64xbf16>
    %78 = vector.shape_cast %77 : vector<1x64x64xbf16> to vector<64x64xbf16>
    %79 = vector.shape_cast %76 : vector<64x64xbf16> to vector<1x64x64xbf16>
    tpu.vector_store %arg8[%c0_22, %c0_23, %c0_24], %79 {strides = array<i32>} : memref<1x64x128xbf16, #tpu.memory_space<vmem>>, vector<1x64x64xbf16>,
    %c2_i32_25 = arith.constant 2 : i32
    %80 = arith.muli %c2_i32_25, %arg0 : i32
    %c1_i32 = arith.constant 1 : i32
    %81 = arith.addi %80, %c1_i32 : i32
    %82 = arith.index_cast %81 : i32 to index
    %83 = memref.load %arg1[%82] : memref<2xi32, #tpu.memory_space<smem>>
    %84 = arith.index_cast %83 : i32 to index
    %c0_26 = arith.constant 0 : index
    %c0_27 = arith.constant 0 : index
    %85 = vector.load %arg2[%84, %c0_26, %c0_27] : memref<2x64x16xbf16, #tpu.memory_space<vmem>>, vector<1x64x16xbf16>
    %86 = vector.shape_cast %85 : vector<1x64x16xbf16> to vector<64x16xbf16>
    %c1 = arith.constant 1 : index
    %c0_28 = arith.constant 0 : index
    %c0_29 = arith.constant 0 : index
    %87 = vector.load %arg3[%c1, %c0_28, %c0_29] : memref<2x56x16xbf16, #tpu.memory_space<vmem>>, vector<1x56x16xbf16>
    %88 = vector.shape_cast %87 : vector<1x56x16xbf16> to vector<56x16xbf16>
    %c1_30 = arith.constant 1 : index
    %c0_31 = arith.constant 0 : index
    %c0_32 = arith.constant 0 : index
    %89 = vector.load %arg4[%c1_30, %c0_31, %c0_32] : memref<2x16x56xbf16, #tpu.memory_space<vmem>>, vector<1x16x56xbf16>
    %90 = vector.shape_cast %89 : vector<1x16x56xbf16> to vector<16x56xbf16>
    %cst_33 = arith.constant dense<0.000000e+00> : vector<64x56xf32>
    %91 = tpu.matmul %86, %90, %cst_33 {dimension_numbers = #tpu.dot_dimension_numbers<[1], [0], [0], [1], [0, 0, 1, 1], [], []>} : vector<64x16xbf16>, vector<16x56xbf16>, vector<64x56xf32> -> vector<64x56xf32>
    %92 = vector.extract_strided_slice %91 {offsets = [0, 0], sizes = [16, 56], strides = [1, 1]} : vector<64x56xf32> to vector<16x56xf32>
    %93 = arith.truncf %92 : vector<16x56xf32> to vector<16x56xbf16>
    %94 = vector.extract_strided_slice %91 {offsets = [16, 0], sizes = [16, 56], strides = [1, 1]} : vector<64x56xf32> to vector<16x56xf32>
    %95 = arith.truncf %94 : vector<16x56xf32> to vector<16x56xbf16>
    %96 = vector.extract_strided_slice %91 {offsets = [32, 0], sizes = [16, 56], strides = [1, 1]} : vector<64x56xf32> to vector<16x56xf32>
    %97 = arith.truncf %96 : vector<16x56xf32> to vector<16x56xbf16>
    %98 = vector.extract_strided_slice %91 {offsets = [48, 0], sizes = [16, 56], strides = [1, 1]} : vector<64x56xf32> to vector<16x56xf32>
    %99 = arith.truncf %98 : vector<16x56xf32> to vector<16x56xbf16>
    %100 = tpu.concatenate %93, %95, %97, %99 in 1 : vector<16x56xbf16>, vector<16x56xbf16>, vector<16x56xbf16>, vector<16x56xbf16> -> vector<16x224xbf16>
    %cst_34 = arith.constant dense<0.000000e+00> : vector<56x224xf32>
    %101 = tpu.matmul %88, %100, %cst_34 {dimension_numbers = #tpu.dot_dimension_numbers<[1], [0], [0], [1], [0, 0, 1, 1], [], []>} : vector<56x16xbf16>, vector<16x224xbf16>, vector<56x224xf32> -> vector<56x224xf32>
    %c1_35 = arith.constant 1 : index
    %c0_36 = arith.constant 0 : index
    %c0_37 = arith.constant 0 : index
    %102 = vector.load %arg5[%c1_35, %c0_36, %c0_37] : memref<2x56x224xf32, #tpu.memory_space<vmem>>, vector<1x56x224xf32>
    %103 = vector.shape_cast %102 : vector<1x56x224xf32> to vector<56x224xf32>
    %104 = vector.extract_strided_slice %103 {offsets = [0, 0], sizes = [56, 56], strides = [1, 1]} : vector<56x224xf32> to vector<56x56xf32>
    %105 = vector.extract_strided_slice %103 {offsets = [0, 56], sizes = [56, 56], strides = [1, 1]} : vector<56x224xf32> to vector<56x56xf32>
    %106 = arith.maximumf %104, %105 : vector<56x56xf32>
    %107 = vector.extract_strided_slice %103 {offsets = [0, 112], sizes = [56, 56], strides = [1, 1]} : vector<56x224xf32> to vector<56x56xf32>
    %108 = arith.maximumf %106, %107 : vector<56x56xf32>
    %109 = vector.extract_strided_slice %103 {offsets = [0, 168], sizes = [56, 56], strides = [1, 1]} : vector<56x224xf32> to vector<56x56xf32>
    %110 = arith.maximumf %108, %109 : vector<56x56xf32>
    %cst_38 = arith.constant 0.000000e+00 : f32
    %111 = vector.broadcast %cst_38 : f32 to vector<56x56xf32>
    %cst_39 = arith.constant 0.000000e+00 : f32
    %112 = vector.broadcast %cst_39 : f32 to vector<56x56xf32>
    %113 = vector.extract_strided_slice %103 {offsets = [0, 0], sizes = [56, 56], strides = [1, 1]} : vector<56x224xf32> to vector<56x56xf32>
    %114 = arith.subf %113, %110 : vector<56x56xf32>
    %115 = math.exp %114 : vector<56x56xf32>
    %116 = arith.addf %112, %115 : vector<56x56xf32>
    %117 = vector.extract_strided_slice %101 {offsets = [0, 0], sizes = [56, 56], strides = [1, 1]} : vector<56x224xf32> to vector<56x56xf32>
    %118 = arith.mulf %117, %115 : vector<56x56xf32>
    %119 = arith.addf %111, %118 : vector<56x56xf32>
    %120 = vector.extract_strided_slice %103 {offsets = [0, 56], sizes = [56, 56], strides = [1, 1]} : vector<56x224xf32> to vector<56x56xf32>
    %121 = arith.subf %120, %110 : vector<56x56xf32>
    %122 = math.exp %121 : vector<56x56xf32>
    %123 = arith.addf %116, %122 : vector<56x56xf32>
    %124 = vector.extract_strided_slice %101 {offsets = [0, 56], sizes = [56, 56], strides = [1, 1]} : vector<56x224xf32> to vector<56x56xf32>
    %125 = arith.mulf %124, %122 : vector<56x56xf32>
    %126 = arith.addf %119, %125 : vector<56x56xf32>
    %127 = vector.extract_strided_slice %103 {offsets = [0, 112], sizes = [56, 56], strides = [1, 1]} : vector<56x224xf32> to vector<56x56xf32>
    %128 = arith.subf %127, %110 : vector<56x56xf32>
    %129 = math.exp %128 : vector<56x56xf32>
    %130 = arith.addf %123, %129 : vector<56x56xf32>
    %131 = vector.extract_strided_slice %101 {offsets = [0, 112], sizes = [56, 56], strides = [1, 1]} : vector<56x224xf32> to vector<56x56xf32>
    %132 = arith.mulf %131, %129 : vector<56x56xf32>
    %133 = arith.addf %126, %132 : vector<56x56xf32>
    %134 = vector.extract_strided_slice %103 {offsets = [0, 168], sizes = [56, 56], strides = [1, 1]} : vector<56x224xf32> to vector<56x56xf32>
    %135 = arith.subf %134, %110 : vector<56x56xf32>
    %136 = math.exp %135 : vector<56x56xf32>
    %137 = arith.addf %130, %136 : vector<56x56xf32>
    %138 = vector.extract_strided_slice %101 {offsets = [0, 168], sizes = [56, 56], strides = [1, 1]} : vector<56x224xf32> to vector<56x56xf32>
    %139 = arith.mulf %138, %136 : vector<56x56xf32>
    %140 = arith.addf %133, %139 : vector<56x56xf32>
    %141 = tpu.reciprocal %137 {approx = true} : vector<56x56xf32> -> vector<56x56xf32>
    %142 = arith.mulf %140, %141 : vector<56x56xf32>
    %143 = arith.negf %142 : vector<56x56xf32>
    %144 = math.exp %143 : vector<56x56xf32>
    %cst_40 = arith.constant 1.000000e+00 : f32
    %145 = vector.broadcast %cst_40 : f32 to vector<56x56xf32>
    %146 = arith.addf %145, %144 : vector<56x56xf32>
    %147 = arith.divf %145, %146 : vector<56x56xf32>
    %148 = arith.truncf %147 : vector<56x56xf32> to vector<56x56xbf16>
    %c1_41 = arith.constant 1 : index
    %c0_42 = arith.constant 0 : index
    %c0_43 = arith.constant 0 : index
    %149 = vector.load %arg7[%c1_41, %c0_42, %c0_43] : memref<2x56x64xbf16, #tpu.memory_space<vmem>>, vector<1x56x64xbf16>
    %150 = vector.shape_cast %149 : vector<1x56x64xbf16> to vector<56x64xbf16>
    %cst_44 = arith.constant dense<0.000000e+00> : vector<56x64xf32>
    %151 = tpu.matmul %148, %150, %cst_44 {dimension_numbers = #tpu.dot_dimension_numbers<[1], [0], [0], [1], [0, 0, 1, 1], [], []>} : vector<56x56xbf16>, vector<56x64xbf16>, vector<56x64xf32> -> vector<56x64xf32>
    %c1_45 = arith.constant 1 : index
    %c0_46 = arith.constant 0 : index
    %c0_47 = arith.constant 0 : index
    %152 = vector.load %arg6[%c1_45, %c0_46, %c0_47] : memref<2x64x56xbf16, #tpu.memory_space<vmem>>, vector<1x64x56xbf16>
    %153 = vector.shape_cast %152 : vector<1x64x56xbf16> to vector<64x56xbf16>
    %154 = arith.truncf %151 : vector<56x64xf32> to vector<56x64xbf16>
    %cst_48 = arith.constant dense<0.000000e+00> : vector<64x64xf32>
    %155 = tpu.matmul %153, %154, %cst_48 {dimension_numbers = #tpu.dot_dimension_numbers<[1], [0], [0], [1], [0, 0, 1, 1], [], []>} : vector<64x56xbf16>, vector<56x64xbf16>, vector<64x64xf32> -> vector<64x64xf32>
    %156 = arith.truncf %155 : vector<64x64xf32> to vector<64x64xbf16>
    %c0_49 = arith.constant 0 : index
    %c0_50 = arith.constant 0 : index
    %c64 = arith.constant 64 : index
    %157 = vector.load %arg8[%c0_49, %c0_50, %c64] : memref<1x64x128xbf16, #tpu.memory_space<vmem>>, vector<1x64x64xbf16>
    %158 = vector.shape_cast %157 : vector<1x64x64xbf16> to vector<64x64xbf16>
    %159 = vector.shape_cast %156 : vector<64x64xbf16> to vector<1x64x64xbf16>
    tpu.vector_store %arg8[%c0_49, %c0_50, %c64], %159 {strides = array<i32>} : memref<1x64x128xbf16, #tpu.memory_space<vmem>>, vector<1x64x64xbf16>,
    return
  }
  func.func @transform_0(%arg0: i32, %arg1: memref<2xi32, #tpu.memory_space<smem>>) -> (i32, i32, i32) {
    %c0_i32 = arith.constant 0 : i32
    %c0_i32_0 = arith.constant 0 : i32
    %c0_i32_1 = arith.constant 0 : i32
    %c0_i32_2 = arith.constant 0 : i32
    return %c0_i32, %c0_i32_0, %c0_i32_1 : i32, i32, i32
  }
  func.func @transform_1(%arg0: i32, %arg1: memref<2xi32, #tpu.memory_space<smem>>) -> (i32, i32, i32) {
    %c0_i32 = arith.constant 0 : i32
    %c0_i32_0 = arith.constant 0 : i32
    %c0_i32_1 = arith.constant 0 : i32
    return %arg0, %c0_i32, %c0_i32_0 : i32, i32, i32
  }
  func.func @transform_2(%arg0: i32, %arg1: memref<2xi32, #tpu.memory_space<smem>>) -> (i32, i32, i32) {
    %c0_i32 = arith.constant 0 : i32
    %c0_i32_0 = arith.constant 0 : i32
    %c0_i32_1 = arith.constant 0 : i32
    return %arg0, %c0_i32, %c0_i32_0 : i32, i32, i32
  }
  func.func @transform_3(%arg0: i32, %arg1: memref<2xi32, #tpu.memory_space<smem>>) -> (i32, i32, i32) {
    %c0_i32 = arith.constant 0 : i32
    %c0_i32_0 = arith.constant 0 : i32
    %c0_i32_1 = arith.constant 0 : i32
    return %arg0, %c0_i32, %c0_i32_0 : i32, i32, i32
  }
  func.func @transform_4(%arg0: i32, %arg1: memref<2xi32, #tpu.memory_space<smem>>) -> (i32, i32, i32) {
    %c0_i32 = arith.constant 0 : i32
    %c0_i32_0 = arith.constant 0 : i32
    %c0_i32_1 = arith.constant 0 : i32
    return %arg0, %c0_i32, %c0_i32_0 : i32, i32, i32
  }
  func.func @transform_5(%arg0: i32, %arg1: memref<2xi32, #tpu.memory_space<smem>>) -> (i32, i32, i32) {
    %c0_i32 = arith.constant 0 : i32
    %c0_i32_0 = arith.constant 0 : i32
    %c0_i32_1 = arith.constant 0 : i32
    return %arg0, %c0_i32, %c0_i32_0 : i32, i32, i32
  }
  func.func @transform_6(%arg0: i32, %arg1: memref<2xi32, #tpu.memory_space<smem>>) -> (i32, i32, i32) {
    %c0_i32 = arith.constant 0 : i32
    %c0_i32_0 = arith.constant 0 : i32
    %c0_i32_1 = arith.constant 0 : i32
    return %arg0, %c0_i32, %c0_i32_0 : i32, i32, i32
  }
}

</mosaic_0001>

<llo_original>
// kernel: blender_forward.1
$region0: #{blender_forward.1}
  #allocation0 [shape = 'u32[]', space=smem, size = 0x4, offset = 0x4, fixed_abs, tag = 'smem constant byte address 0x4 - core index']
  #allocation1 [shape = 'u32[72,128]{1,0:T(1,128)}', space=vmem, size = 0x9000, scoped, tag = 'internal scratch']
  #allocation2 [shape = 's32[1]{0}', space=sflag, size = 0x4, scoped, tag = 'scoped memory for blender_forward.1']
  #allocation3 [shape = 'u8[512]{0}', space=smem, size = 0x200, scoped, tag = 'prefetched SMEM operand 0']
  %s0 = inlined_call_operand.vmem [shape: s32[2], index: 0, kind: input, shape index: {}]
  %s1 = inlined_call_operand.vmem [shape: bf16[2,64,16], index: 1, kind: input, shape index: {}]
  %s2 = inlined_call_operand.vmem [shape: bf16[2,56,16], index: 2, kind: input, shape index: {}]
  %s3 = inlined_call_operand.vmem [shape: bf16[2,16,56], index: 3, kind: input, shape index: {}]
  %s4 = inlined_call_operand.vmem [shape: f32[2,56,224], index: 4, kind: input, shape index: {}]
  %s5 = inlined_call_operand.vmem [shape: bf16[2,64,56], index: 5, kind: input, shape index: {}]
  %s6 = inlined_call_operand.vmem [shape: bf16[2,56,64], index: 6, kind: input, shape index: {}]
  %s7 = inlined_call_operand.vmem [shape: bf16[1,64,128], index: 7, kind: output, shape index: {}]
  %s8 = sld [smem:[#allocation0]]
  $region34: #{blender_forward.1} parent=0
    _
  %s10 = ssub.s32 1, %s8
  %s11 = scalar_select 0, %s10, %s8
  %s13 = sshll.u32 %s0, 4
  %s14 = int_to_ptr.vmem [resolvable:$true] %s13
  %16 = dma.vmem_to_smem %s14, 16, [#allocation3], [#allocation2]
  %18 = dma.done [#allocation2], 16
  %19 = sfence
  // Predicated region
  $region2: #{blender_forward.1} parent=0 // pred_check
    _
  $region3: #{blender_forward.1} parent=0 // pred_check_branch
    %21 = sbr.rel (0) target = $region5
  $region4: #{blender_forward.1} parent=0 // pred_region
    _
  $region5: #{blender_forward.1} parent=0 // pred_fallthru
    _
  // Predicated region
  $region6: #{blender_forward.1} parent=0 // pred_check
    _
  $region7: #{blender_forward.1} parent=0 // pred_check_branch
    %23 = sbr.rel (0) target = $region9
  $region8: #{blender_forward.1} parent=0 // pred_region
    _
  $region9: #{blender_forward.1} parent=0 // pred_fallthru
    _
  // Predicated region
  $region10: #{blender_forward.1} parent=0 // pred_check
    _
  $region11: #{blender_forward.1} parent=0 // pred_check_branch
    %25 = sbr.rel (0) target = $region13
  $region12: #{blender_forward.1} parent=0 // pred_region
    _
  $region13: #{blender_forward.1} parent=0 // pred_fallthru
    _
  // Predicated region
  $region14: #{blender_forward.1} parent=0 // pred_check
    _
  $region15: #{blender_forward.1} parent=0 // pred_check_branch
    %27 = sbr.rel (0) target = $region17
  $region16: #{blender_forward.1} parent=0 // pred_region
    _
  $region17: #{blender_forward.1} parent=0 // pred_fallthru
    _
  // Predicated region
  $region18: #{blender_forward.1} parent=0 // pred_check
    _
  $region19: #{blender_forward.1} parent=0 // pred_check_branch
    %29 = sbr.rel (0) target = $region21
  $region20: #{blender_forward.1} parent=0 // pred_region
    _
  $region21: #{blender_forward.1} parent=0 // pred_fallthru
    _
  // Predicated region
  $region22: #{blender_forward.1} parent=0 // pred_check
    _
  $region23: #{blender_forward.1} parent=0 // pred_check_branch
    %31 = sbr.rel (0) target = $region25
  $region24: #{blender_forward.1} parent=0 // pred_region
    _
  $region25: #{blender_forward.1} parent=0 // pred_fallthru
    _
  %s33 = smul.u32 0, 2
  %s34 = sld [smem:[#allocation3 + %s33]]
  %s35 = smul.u32 %s34, 8
  %s36 = smul.addr %s35, 4
  %s37 = scalar_lea.vmem %s1, %s36
  %v38 = vld [vmem:[%s37] sm:$0xf]
  %v39 = vld [vmem:[%s37 + $0x4] sm:$0xf]
  %v40 = vld [vmem:[%s37 + $0x8] sm:$0xf]
  %v41 = vld [vmem:[%s37 + $0xc] sm:$0xf]
  %v42 = vld [vmem:[%s37 + $0x10] sm:$0xf]
  %v43 = vld [vmem:[%s37 + $0x14] sm:$0xf]
  %v44 = vld [vmem:[%s37 + $0x18] sm:$0xf]
  %v45 = vld [vmem:[%s37 + $0x1c] sm:$0xf]
  %v46 = vld [vmem:[%s2] sm:$0xf]
  %v47 = vld [vmem:[%s2 + $0x4] sm:$0xf]
  %v48 = vld [vmem:[%s2 + $0x8] sm:$0xf]
  %v49 = vld [vmem:[%s2 + $0xc] sm:$0xf]
  %v50 = vld [vmem:[%s2 + $0x10] sm:$0xf]
  %v51 = vld [vmem:[%s2 + $0x14] sm:$0xf]
  %v52 = vld [vmem:[%s2 + $0x18] sm:$0xf]
  %v53 = vld [vmem:[%s3] sm:$0xf]
  %v54 = vld [vmem:[%s3 + $0x4] sm:$0xf]
  %v63 = vunpack.c.l.b16 %v38
  %v64 = vunpack.c.l.b16 %v39
  %v65 = vunpack.c.l.b16 %v40
  %v66 = vunpack.c.l.b16 %v41
  %v67 = vunpack.c.l.b16 %v42
  %v68 = vunpack.c.l.b16 %v43
  %v69 = vunpack.c.l.b16 %v44
  %v70 = vunpack.c.l.b16 %v45
  %v71 = vpack.c.b16 %v64, %v63
  %v72 = vpack.c.b16 %v66, %v65
  %v73 = vpack.c.b16 %v68, %v67
  %v74 = vpack.c.b16 %v70, %v69
  %v77 = vunpack.c.l.b16 %v53
  %v78 = vunpack.c.l.b16 %v54
  %v79 = vpack.c.b16 %v78, %v77
  %vm81 = vcmask 130048
  %v83 = vsel %vm81, %v71, 0
  %v86 = vsel %vm81, %v72, 0
  %v89 = vsel %vm81, %v73, 0
  %v92 = vsel %vm81, %v74, 0
  %94 = vmatpush.bf16.msra.mxu0 0
  %95 = vmatpush.bf16.msra.mxu0 0
  %96 = vmatpush.bf16.msra.mxu0 0
  %97 = vmatpush.bf16.msra.mxu0 0
  %98 = vmatpush.bf16.msra.mxu0 0
  %99 = vmatpush.bf16.msra.mxu0 0
  %100 = vmatpush.bf16.msra.mxu0 0
  %101 = vmatpush.bf16.msra.mxu0 %v79
  %102 = vmatmul.bf16.gmra.mxu0 %v83
  %v103 = vpop.f32.mrf.mxu0
  %v104 = vadd.f32 0.0, %v103
  %v105 = vpop.f32.mrf.mxu0
  %v106 = vadd.f32 0.0, %v105
  %107 = vmatmul.bf16.gmra.mxu0 %v86
  %v108 = vpop.f32.mrf.mxu0
  %v109 = vadd.f32 0.0, %v108
  %v110 = vpop.f32.mrf.mxu0
  %v111 = vadd.f32 0.0, %v110
  %112 = vmatmul.bf16.gmra.mxu0 %v89
  %v113 = vpop.f32.mrf.mxu0
  %v114 = vadd.f32 0.0, %v113
  %v115 = vpop.f32.mrf.mxu0
  %v116 = vadd.f32 0.0, %v115
  %117 = vmatmul.bf16.gmra.mxu0 %v92
  %v118 = vpop.f32.mrf.mxu0
  %v119 = vadd.f32 0.0, %v118
  %v120 = vpop.f32.mrf.mxu0
  %v121 = vadd.f32 0.0, %v120
  %122 = vdwg.mxu0
  %v123 = vpack.c.bf16 %v104, %v104
  %v124 = vpack.c.bf16 %v106, %v106
  %v125 = vpack.c.bf16 %v109, %v109
  %v126 = vpack.c.bf16 %v111, %v111
  %v127 = vpack.c.bf16 %v114, %v114
  %v128 = vpack.c.bf16 %v116, %v116
  %v129 = vpack.c.bf16 %v119, %v119
  %v130 = vpack.c.bf16 %v121, %v121
  %v133 = vunpack.c.l.b16 %v123
  %v134 = vunpack.c.l.b16 %v124
  %v135 = vpack.c.b16 %v134, %v133
  %v138 = vunpack.c.l.b16 %v125
  %v139 = vunpack.c.l.b16 %v126
  %v140 = vpack.c.b16 %v139, %v138
  %141 = vrot.lane.b32.xlu0 %v140, 56
  %v142 = vpop.permute.xlu0 %141
  %v145 = vunpack.c.l.b16 %v127
  %v146 = vunpack.c.l.b16 %v128
  %v147 = vpack.c.b16 %v146, %v145
  %148 = vrot.lane.b32.xlu0 %v147, 112
  %v149 = vpop.permute.xlu0 %148
  %v152 = vunpack.c.l.b16 %v129
  %v153 = vunpack.c.l.b16 %v130
  %v154 = vpack.c.b16 %v153, %v152
  %155 = vrot.lane.b32.xlu0 %v154, 40
  %v156 = vpop.permute.xlu0 %155
  %vm157 = vcmask 457728
  %v160 = vsel %vm157, %v135, %v142
  %vm161 = vcmask 916480
  %v163 = vsel %vm161, %v160, %v149
  %vm165 = vcmask 326656
  %v167 = vsel %vm165, %v149, %v156
  %v176 = vunpack.c.l.b16 %v46
  %v177 = vunpack.c.l.b16 %v47
  %v178 = vunpack.c.l.b16 %v48
  %v179 = vunpack.c.l.b16 %v49
  %v180 = vunpack.c.l.b16 %v50
  %v181 = vunpack.c.l.b16 %v51
  %v182 = vunpack.c.l.b16 %v52
  %v183 = vpack.c.b16 %v177, %v176
  %v184 = vpack.c.b16 %v179, %v178
  %v185 = vpack.c.b16 %v181, %v180
  %v186 = vpack.c.b16 %v182, %v182
  %v188 = vsel %vm81, %v183, 0
  %v191 = vsel %vm81, %v184, 0
  %v194 = vsel %vm81, %v185, 0
  %v197 = vsel %vm81, %v186, 0
  %199 = vmatpush.bf16.msra.mxu0 0
  %200 = vmatpush.bf16.msra.mxu0 0
  %201 = vmatpush.bf16.msra.mxu0 0
  %202 = vmatpush.bf16.msra.mxu0 0
  %203 = vmatpush.bf16.msra.mxu0 0
  %204 = vmatpush.bf16.msra.mxu0 0
  %205 = vmatpush.bf16.msra.mxu0 0
  %206 = vmatpush.bf16.msra.mxu0 %v163
  %207 = vmatmul.bf16.gmra.mxu0 %v188
  %v208 = vpop.f32.mrf.mxu0
  %v209 = vadd.f32 0.0, %v208
  %v210 = vpop.f32.mrf.mxu0
  %v211 = vadd.f32 0.0, %v210
  %212 = vmatmul.bf16.gmra.mxu0 %v191
  %v213 = vpop.f32.mrf.mxu0
  %v214 = vadd.f32 0.0, %v213
  %v215 = vpop.f32.mrf.mxu0
  %v216 = vadd.f32 0.0, %v215
  %217 = vmatmul.bf16.gmra.mxu0 %v194
  %v218 = vpop.f32.mrf.mxu0
  %v219 = vadd.f32 0.0, %v218
  %v220 = vpop.f32.mrf.mxu0
  %v221 = vadd.f32 0.0, %v220
  %222 = vmatmul.bf16.gmra.mxu0 %v197
  %v223 = vpop.f32.mrf.mxu0
  %v224 = vadd.f32 0.0, %v223
  %v225 = vpop.f32.mrf.mxu0
  %226 = vdwg.mxu0
  %227 = vmatpush.bf16.msra.mxu0 0
  %228 = vmatpush.bf16.msra.mxu0 0
  %229 = vmatpush.bf16.msra.mxu0 0
  %230 = vmatpush.bf16.msra.mxu0 0
  %231 = vmatpush.bf16.msra.mxu0 0
  %232 = vmatpush.bf16.msra.mxu0 0
  %233 = vmatpush.bf16.msra.mxu0 0
  %234 = vmatpush.bf16.msra.mxu0 %v167
  %235 = vmatmul.bf16.gmra.mxu0 %v188
  %v236 = vpop.f32.mrf.mxu0
  %v237 = vadd.f32 0.0, %v236
  %v238 = vpop.f32.mrf.mxu0
  %v239 = vadd.f32 0.0, %v238
  %240 = vmatmul.bf16.gmra.mxu0 %v191
  %v241 = vpop.f32.mrf.mxu0
  %v242 = vadd.f32 0.0, %v241
  %v243 = vpop.f32.mrf.mxu0
  %v244 = vadd.f32 0.0, %v243
  %245 = vmatmul.bf16.gmra.mxu0 %v194
  %v246 = vpop.f32.mrf.mxu0
  %v247 = vadd.f32 0.0, %v246
  %v248 = vpop.f32.mrf.mxu0
  %v249 = vadd.f32 0.0, %v248
  %250 = vmatmul.bf16.gmra.mxu0 %v197
  %v251 = vpop.f32.mrf.mxu0
  %v252 = vadd.f32 0.0, %v251
  %v253 = vpop.f32.mrf.mxu0
  %254 = vdwg.mxu0
  %v255 = vld [vmem:[%s4] sm:$0xff]
  %v256 = vld [vmem:[%s4 + $0x8] sm:$0xff]
  %v257 = vld [vmem:[%s4 + $0x10] sm:$0xff]
  %v258 = vld [vmem:[%s4 + $0x18] sm:$0xff]
  %v259 = vld [vmem:[%s4 + $0x20] sm:$0xff]
  %v260 = vld [vmem:[%s4 + $0x28] sm:$0xff]
  %v261 = vld [vmem:[%s4 + $0x30] sm:$0xff]
  %v262 = vld [vmem:[%s4 + $0x38] sm:$0xff]
  %v263 = vld [vmem:[%s4 + $0x40] sm:$0xff]
  %v264 = vld [vmem:[%s4 + $0x48] sm:$0xff]
  %v265 = vld [vmem:[%s4 + $0x50] sm:$0xff]
  %v266 = vld [vmem:[%s4 + $0x58] sm:$0xff]
  %v267 = vld [vmem:[%s4 + $0x60] sm:$0xff]
  %v268 = vld [vmem:[%s4 + $0x68] sm:$0xff]
  %276 = vrot.lane.b32.xlu0 %v255, 72
  %v277 = vpop.permute.xlu0 %276
  %278 = vrot.lane.b32.xlu0 %v257, 72
  %v279 = vpop.permute.xlu0 %278
  %280 = vrot.lane.b32.xlu0 %v259, 72
  %v281 = vpop.permute.xlu0 %280
  %282 = vrot.lane.b32.xlu0 %v261, 72
  %v283 = vpop.permute.xlu0 %282
  %284 = vrot.lane.b32.xlu0 %v263, 72
  %v285 = vpop.permute.xlu0 %284
  %286 = vrot.lane.b32.xlu0 %v265, 72
  %v287 = vpop.permute.xlu0 %286
  %288 = vrot.lane.b32.xlu0 %v267, 72
  %v289 = vpop.permute.xlu0 %288
  %v297 = vmax.f32 %v255, %v277
  %v298 = vmax.f32 %v257, %v279
  %v299 = vmax.f32 %v259, %v281
  %v300 = vmax.f32 %v261, %v283
  %v301 = vmax.f32 %v263, %v285
  %v302 = vmax.f32 %v265, %v287
  %v303 = vmax.f32 %v267, %v289
  %311 = vrot.lane.b32.xlu0 %v255, 16
  %v312 = vpop.permute.xlu0 %311
  %313 = vrot.lane.b32.xlu0 %v256, 16
  %v314 = vpop.permute.xlu0 %313
  %315 = vrot.lane.b32.xlu0 %v257, 16
  %v316 = vpop.permute.xlu0 %315
  %317 = vrot.lane.b32.xlu0 %v258, 16
  %v318 = vpop.permute.xlu0 %317
  %319 = vrot.lane.b32.xlu0 %v259, 16
  %v320 = vpop.permute.xlu0 %319
  %321 = vrot.lane.b32.xlu0 %v260, 16
  %v322 = vpop.permute.xlu0 %321
  %323 = vrot.lane.b32.xlu0 %v261, 16
  %v324 = vpop.permute.xlu0 %323
  %325 = vrot.lane.b32.xlu0 %v262, 16
  %v326 = vpop.permute.xlu0 %325
  %327 = vrot.lane.b32.xlu0 %v263, 16
  %v328 = vpop.permute.xlu0 %327
  %329 = vrot.lane.b32.xlu0 %v264, 16
  %v330 = vpop.permute.xlu0 %329
  %331 = vrot.lane.b32.xlu0 %v265, 16
  %v332 = vpop.permute.xlu0 %331
  %333 = vrot.lane.b32.xlu0 %v266, 16
  %v334 = vpop.permute.xlu0 %333
  %335 = vrot.lane.b32.xlu0 %v267, 16
  %v336 = vpop.permute.xlu0 %335
  %337 = vrot.lane.b32.xlu0 %v268, 16
  %v338 = vpop.permute.xlu0 %337
  %v339 = vsel %vm81, %v312, %v314
  %v340 = vsel %vm81, %v316, %v318
  %v341 = vsel %vm81, %v320, %v322
  %v342 = vsel %vm81, %v324, %v326
  %v343 = vsel %vm81, %v328, %v330
  %v344 = vsel %vm81, %v332, %v334
  %v345 = vsel %vm81, %v336, %v338
  %v353 = vmax.f32 %v297, %v339
  %v354 = vmax.f32 %v298, %v340
  %v355 = vmax.f32 %v299, %v341
  %v356 = vmax.f32 %v300, %v342
  %v357 = vmax.f32 %v301, %v343
  %v358 = vmax.f32 %v302, %v344
  %v359 = vmax.f32 %v303, %v345
  %360 = vrot.lane.b32.xlu0 %v256, 88
  %v361 = vpop.permute.xlu0 %360
  %362 = vrot.lane.b32.xlu0 %v258, 88
  %v363 = vpop.permute.xlu0 %362
  %364 = vrot.lane.b32.xlu0 %v260, 88
  %v365 = vpop.permute.xlu0 %364
  %366 = vrot.lane.b32.xlu0 %v262, 88
  %v367 = vpop.permute.xlu0 %366
  %368 = vrot.lane.b32.xlu0 %v264, 88
  %v369 = vpop.permute.xlu0 %368
  %370 = vrot.lane.b32.xlu0 %v266, 88
  %v371 = vpop.permute.xlu0 %370
  %372 = vrot.lane.b32.xlu0 %v268, 88
  %v373 = vpop.permute.xlu0 %372
  %v381 = vmax.f32 %v353, %v361
  %v382 = vmax.f32 %v354, %v363
  %v383 = vmax.f32 %v355, %v365
  %v384 = vmax.f32 %v356, %v367
  %v385 = vmax.f32 %v357, %v369
  %v386 = vmax.f32 %v358, %v371
  %v387 = vmax.f32 %v359, %v373
  %v388 = vsub.f32 %v255, %v381
  %v389 = vsub.f32 %v257, %v382
  %v390 = vsub.f32 %v259, %v383
  %v391 = vsub.f32 %v261, %v384
  %v392 = vsub.f32 %v263, %v385
  %v393 = vsub.f32 %v265, %v386
  %v394 = vsub.f32 %v267, %v387
  %v395 = vmul.f32 %v388, 1.442695
  %v396 = vpow.pop %v395
  %v397 = vmul.f32 %v389, 1.442695
  %v398 = vpow.pop %v397
  %v399 = vmul.f32 %v390, 1.442695
  %v400 = vpow.pop %v399
  %v401 = vmul.f32 %v391, 1.442695
  %v402 = vpow.pop %v401
  %v403 = vmul.f32 %v392, 1.442695
  %v404 = vpow.pop %v403
  %v405 = vmul.f32 %v393, 1.442695
  %v406 = vpow.pop %v405
  %v407 = vmul.f32 %v394, 1.442695
  %v408 = vpow.pop %v407
  %v409 = vadd.f32 %v396, 0.0
  %v410 = vadd.f32 %v398, 0.0
  %v411 = vadd.f32 %v400, 0.0
  %v412 = vadd.f32 %v402, 0.0
  %v413 = vadd.f32 %v404, 0.0
  %v414 = vadd.f32 %v406, 0.0
  %v415 = vadd.f32 %v408, 0.0
  %v416 = vmul.f32 %v209, %v396
  %v417 = vmul.f32 %v211, %v398
  %v418 = vmul.f32 %v214, %v400
  %v419 = vmul.f32 %v216, %v402
  %v420 = vmul.f32 %v219, %v404
  %v421 = vmul.f32 %v221, %v406
  %v422 = vmul.f32 %v224, %v408
  %v423 = vadd.f32 %v416, 0.0
  %v424 = vadd.f32 %v417, 0.0
  %v425 = vadd.f32 %v418, 0.0
  %v426 = vadd.f32 %v419, 0.0
  %v427 = vadd.f32 %v420, 0.0
  %v428 = vadd.f32 %v421, 0.0
  %v429 = vadd.f32 %v422, 0.0
  %437 = vrot.lane.b32.xlu0 %v381, 56
  %v438 = vpop.permute.xlu0 %437
  %439 = vrot.lane.b32.xlu0 %v382, 56
  %v440 = vpop.permute.xlu0 %439
  %441 = vrot.lane.b32.xlu0 %v383, 56
  %v442 = vpop.permute.xlu0 %441
  %443 = vrot.lane.b32.xlu0 %v384, 56
  %v444 = vpop.permute.xlu0 %443
  %445 = vrot.lane.b32.xlu0 %v385, 56
  %v446 = vpop.permute.xlu0 %445
  %447 = vrot.lane.b32.xlu0 %v386, 56
  %v448 = vpop.permute.xlu0 %447
  %449 = vrot.lane.b32.xlu0 %v387, 56
  %v450 = vpop.permute.xlu0 %449
  %v458 = vsub.f32 %v255, %v438
  %v459 = vsub.f32 %v257, %v440
  %v460 = vsub.f32 %v259, %v442
  %v461 = vsub.f32 %v261, %v444
  %v462 = vsub.f32 %v263, %v446
  %v463 = vsub.f32 %v265, %v448
  %v464 = vsub.f32 %v267, %v450
  %v465 = vmul.f32 %v458, 1.442695
  %v466 = vpow.pop %v465
  %v467 = vmul.f32 %v459, 1.442695
  %v468 = vpow.pop %v467
  %v469 = vmul.f32 %v460, 1.442695
  %v470 = vpow.pop %v469
  %v471 = vmul.f32 %v461, 1.442695
  %v472 = vpow.pop %v471
  %v473 = vmul.f32 %v462, 1.442695
  %v474 = vpow.pop %v473
  %v475 = vmul.f32 %v463, 1.442695
  %v476 = vpow.pop %v475
  %v477 = vmul.f32 %v464, 1.442695
  %v478 = vpow.pop %v477
  %486 = vrot.lane.b32.xlu0 %v466, 72
  %v487 = vpop.permute.xlu0 %486
  %488 = vrot.lane.b32.xlu0 %v468, 72
  %v489 = vpop.permute.xlu0 %488
  %490 = vrot.lane.b32.xlu0 %v470, 72
  %v491 = vpop.permute.xlu0 %490
  %492 = vrot.lane.b32.xlu0 %v472, 72
  %v493 = vpop.permute.xlu0 %492
  %494 = vrot.lane.b32.xlu0 %v474, 72
  %v495 = vpop.permute.xlu0 %494
  %496 = vrot.lane.b32.xlu0 %v476, 72
  %v497 = vpop.permute.xlu0 %496
  %498 = vrot.lane.b32.xlu0 %v478, 72
  %v499 = vpop.permute.xlu0 %498
  %v507 = vadd.f32 %v409, %v487
  %v508 = vadd.f32 %v410, %v489
  %v509 = vadd.f32 %v411, %v491
  %v510 = vadd.f32 %v412, %v493
  %v511 = vadd.f32 %v413, %v495
  %v512 = vadd.f32 %v414, %v497
  %v513 = vadd.f32 %v415, %v499
  %v514 = vmul.f32 %v209, %v466
  %v515 = vmul.f32 %v211, %v468
  %v516 = vmul.f32 %v214, %v470
  %v517 = vmul.f32 %v216, %v472
  %v518 = vmul.f32 %v219, %v474
  %v519 = vmul.f32 %v221, %v476
  %v520 = vmul.f32 %v224, %v478
  %528 = vrot.lane.b32.xlu0 %v514, 72
  %v529 = vpop.permute.xlu0 %528
  %530 = vrot.lane.b32.xlu0 %v515, 72
  %v531 = vpop.permute.xlu0 %530
  %532 = vrot.lane.b32.xlu0 %v516, 72
  %v533 = vpop.permute.xlu0 %532
  %534 = vrot.lane.b32.xlu0 %v517, 72
  %v535 = vpop.permute.xlu0 %534
  %536 = vrot.lane.b32.xlu0 %v518, 72
  %v537 = vpop.permute.xlu0 %536
  %538 = vrot.lane.b32.xlu0 %v519, 72
  %v539 = vpop.permute.xlu0 %538
  %540 = vrot.lane.b32.xlu0 %v520, 72
  %v541 = vpop.permute.xlu0 %540
  %v549 = vadd.f32 %v423, %v529
  %v550 = vadd.f32 %v424, %v531
  %v551 = vadd.f32 %v425, %v533
  %v552 = vadd.f32 %v426, %v535
  %v553 = vadd.f32 %v427, %v537
  %v554 = vadd.f32 %v428, %v539
  %v555 = vadd.f32 %v429, %v541
  %556 = vrot.lane.b32.xlu0 %v381, 112
  %v557 = vpop.permute.xlu0 %556
  %558 = vrot.lane.b32.xlu0 %v382, 112
  %v559 = vpop.permute.xlu0 %558
  %560 = vrot.lane.b32.xlu0 %v383, 112
  %v561 = vpop.permute.xlu0 %560
  %562 = vrot.lane.b32.xlu0 %v384, 112
  %v563 = vpop.permute.xlu0 %562
  %564 = vrot.lane.b32.xlu0 %v385, 112
  %v565 = vpop.permute.xlu0 %564
  %566 = vrot.lane.b32.xlu0 %v386, 112
  %v567 = vpop.permute.xlu0 %566
  %568 = vrot.lane.b32.xlu0 %v387, 112
  %v569 = vpop.permute.xlu0 %568
  %v577 = vsub.f32 %v255, %v557
  %v578 = vsub.f32 %v256, %v557
  %v579 = vsub.f32 %v257, %v559
  %v580 = vsub.f32 %v258, %v559
  %v581 = vsub.f32 %v259, %v561
  %v582 = vsub.f32 %v260, %v561
  %v583 = vsub.f32 %v261, %v563
  %v584 = vsub.f32 %v262, %v563
  %v585 = vsub.f32 %v263, %v565
  %v586 = vsub.f32 %v264, %v565
  %v587 = vsub.f32 %v265, %v567
  %v588 = vsub.f32 %v266, %v567
  %v589 = vsub.f32 %v267, %v569
  %v590 = vsub.f32 %v268, %v569
  %v591 = vmul.f32 %v577, 1.442695
  %v592 = vpow.pop %v591
  %v593 = vmul.f32 %v578, 1.442695
  %v594 = vpow.pop %v593
  %v595 = vmul.f32 %v579, 1.442695
  %v596 = vpow.pop %v595
  %v597 = vmul.f32 %v580, 1.442695
  %v598 = vpow.pop %v597
  %v599 = vmul.f32 %v581, 1.442695
  %v600 = vpow.pop %v599
  %v601 = vmul.f32 %v582, 1.442695
  %v602 = vpow.pop %v601
  %v603 = vmul.f32 %v583, 1.442695
  %v604 = vpow.pop %v603
  %v605 = vmul.f32 %v584, 1.442695
  %v606 = vpow.pop %v605
  %v607 = vmul.f32 %v585, 1.442695
  %v608 = vpow.pop %v607
  %v609 = vmul.f32 %v586, 1.442695
  %v610 = vpow.pop %v609
  %v611 = vmul.f32 %v587, 1.442695
  %v612 = vpow.pop %v611
  %v613 = vmul.f32 %v588, 1.442695
  %v614 = vpow.pop %v613
  %v615 = vmul.f32 %v589, 1.442695
  %v616 = vpow.pop %v615
  %v617 = vmul.f32 %v590, 1.442695
  %v618 = vpow.pop %v617
  %633 = vrot.lane.b32.xlu0 %v592, 16
  %v634 = vpop.permute.xlu0 %633
  %635 = vrot.lane.b32.xlu0 %v594, 16
  %v636 = vpop.permute.xlu0 %635
  %637 = vrot.lane.b32.xlu0 %v596, 16
  %v638 = vpop.permute.xlu0 %637
  %639 = vrot.lane.b32.xlu0 %v598, 16
  %v640 = vpop.permute.xlu0 %639
  %641 = vrot.lane.b32.xlu0 %v600, 16
  %v642 = vpop.permute.xlu0 %641
  %643 = vrot.lane.b32.xlu0 %v602, 16
  %v644 = vpop.permute.xlu0 %643
  %645 = vrot.lane.b32.xlu0 %v604, 16
  %v646 = vpop.permute.xlu0 %645
  %647 = vrot.lane.b32.xlu0 %v606, 16
  %v648 = vpop.permute.xlu0 %647
  %649 = vrot.lane.b32.xlu0 %v608, 16
  %v650 = vpop.permute.xlu0 %649
  %651 = vrot.lane.b32.xlu0 %v610, 16
  %v652 = vpop.permute.xlu0 %651
  %653 = vrot.lane.b32.xlu0 %v612, 16
  %v654 = vpop.permute.xlu0 %653
  %655 = vrot.lane.b32.xlu0 %v614, 16
  %v656 = vpop.permute.xlu0 %655
  %657 = vrot.lane.b32.xlu0 %v616, 16
  %v658 = vpop.permute.xlu0 %657
  %659 = vrot.lane.b32.xlu0 %v618, 16
  %v660 = vpop.permute.xlu0 %659
  %v661 = vsel %vm81, %v634, %v636
  %v662 = vsel %vm81, %v638, %v640
  %v663 = vsel %vm81, %v642, %v644
  %v664 = vsel %vm81, %v646, %v648
  %v665 = vsel %vm81, %v650, %v652
  %v666 = vsel %vm81, %v654, %v656
  %v667 = vsel %vm81, %v658, %v660
  %v675 = vadd.f32 %v507, %v661
  %v676 = vadd.f32 %v508, %v662
  %v677 = vadd.f32 %v509, %v663
  %v678 = vadd.f32 %v510, %v664
  %v679 = vadd.f32 %v511, %v665
  %v680 = vadd.f32 %v512, %v666
  %v681 = vadd.f32 %v513, %v667
  %v682 = vmul.f32 %v209, %v592
  %v683 = vmul.f32 %v237, %v594
  %v684 = vmul.f32 %v211, %v596
  %v685 = vmul.f32 %v239, %v598
  %v686 = vmul.f32 %v214, %v600
  %v687 = vmul.f32 %v242, %v602
  %v688 = vmul.f32 %v216, %v604
  %v689 = vmul.f32 %v244, %v606
  %v690 = vmul.f32 %v219, %v608
  %v691 = vmul.f32 %v247, %v610
  %v692 = vmul.f32 %v221, %v612
  %v693 = vmul.f32 %v249, %v614
  %v694 = vmul.f32 %v224, %v616
  %v695 = vmul.f32 %v252, %v618
  %710 = vrot.lane.b32.xlu0 %v682, 16
  %v711 = vpop.permute.xlu0 %710
  %712 = vrot.lane.b32.xlu0 %v683, 16
  %v713 = vpop.permute.xlu0 %712
  %714 = vrot.lane.b32.xlu0 %v684, 16
  %v715 = vpop.permute.xlu0 %714
  %716 = vrot.lane.b32.xlu0 %v685, 16
  %v717 = vpop.permute.xlu0 %716
  %718 = vrot.lane.b32.xlu0 %v686, 16
  %v719 = vpop.permute.xlu0 %718
  %720 = vrot.lane.b32.xlu0 %v687, 16
  %v721 = vpop.permute.xlu0 %720
  %722 = vrot.lane.b32.xlu0 %v688, 16
  %v723 = vpop.permute.xlu0 %722
  %724 = vrot.lane.b32.xlu0 %v689, 16
  %v725 = vpop.permute.xlu0 %724
  %726 = vrot.lane.b32.xlu0 %v690, 16
  %v727 = vpop.permute.xlu0 %726
  %728 = vrot.lane.b32.xlu0 %v691, 16
  %v729 = vpop.permute.xlu0 %728
  %730 = vrot.lane.b32.xlu0 %v692, 16
  %v731 = vpop.permute.xlu0 %730
  %732 = vrot.lane.b32.xlu0 %v693, 16
  %v733 = vpop.permute.xlu0 %732
  %734 = vrot.lane.b32.xlu0 %v694, 16
  %v735 = vpop.permute.xlu0 %734
  %736 = vrot.lane.b32.xlu0 %v695, 16
  %v737 = vpop.permute.xlu0 %736
  %v738 = vsel %vm81, %v711, %v713
  %v739 = vsel %vm81, %v715, %v717
  %v740 = vsel %vm81, %v719, %v721
  %v741 = vsel %vm81, %v723, %v725
  %v742 = vsel %vm81, %v727, %v729
  %v743 = vsel %vm81, %v731, %v733
  %v744 = vsel %vm81, %v735, %v737
  %v752 = vadd.f32 %v549, %v738
  %v753 = vadd.f32 %v550, %v739
  %v754 = vadd.f32 %v551, %v740
  %v755 = vadd.f32 %v552, %v741
  %v756 = vadd.f32 %v553, %v742
  %v757 = vadd.f32 %v554, %v743
  %v758 = vadd.f32 %v555, %v744
  %759 = vrot.lane.b32.xlu0 %v381, 40
  %v760 = vpop.permute.xlu0 %759
  %761 = vrot.lane.b32.xlu0 %v382, 40
  %v762 = vpop.permute.xlu0 %761
  %763 = vrot.lane.b32.xlu0 %v383, 40
  %v764 = vpop.permute.xlu0 %763
  %765 = vrot.lane.b32.xlu0 %v384, 40
  %v766 = vpop.permute.xlu0 %765
  %767 = vrot.lane.b32.xlu0 %v385, 40
  %v768 = vpop.permute.xlu0 %767
  %769 = vrot.lane.b32.xlu0 %v386, 40
  %v770 = vpop.permute.xlu0 %769
  %771 = vrot.lane.b32.xlu0 %v387, 40
  %v772 = vpop.permute.xlu0 %771
  %v780 = vsub.f32 %v256, %v760
  %v781 = vsub.f32 %v258, %v762
  %v782 = vsub.f32 %v260, %v764
  %v783 = vsub.f32 %v262, %v766
  %v784 = vsub.f32 %v264, %v768
  %v785 = vsub.f32 %v266, %v770
  %v786 = vsub.f32 %v268, %v772
  %v787 = vmul.f32 %v780, 1.442695
  %v788 = vpow.pop %v787
  %v789 = vmul.f32 %v781, 1.442695
  %v790 = vpow.pop %v789
  %v791 = vmul.f32 %v782, 1.442695
  %v792 = vpow.pop %v791
  %v793 = vmul.f32 %v783, 1.442695
  %v794 = vpow.pop %v793
  %v795 = vmul.f32 %v784, 1.442695
  %v796 = vpow.pop %v795
  %v797 = vmul.f32 %v785, 1.442695
  %v798 = vpow.pop %v797
  %v799 = vmul.f32 %v786, 1.442695
  %v800 = vpow.pop %v799
  %808 = vrot.lane.b32.xlu0 %v788, 88
  %v809 = vpop.permute.xlu0 %808
  %810 = vrot.lane.b32.xlu0 %v790, 88
  %v811 = vpop.permute.xlu0 %810
  %812 = vrot.lane.b32.xlu0 %v792, 88
  %v813 = vpop.permute.xlu0 %812
  %814 = vrot.lane.b32.xlu0 %v794, 88
  %v815 = vpop.permute.xlu0 %814
  %816 = vrot.lane.b32.xlu0 %v796, 88
  %v817 = vpop.permute.xlu0 %816
  %818 = vrot.lane.b32.xlu0 %v798, 88
  %v819 = vpop.permute.xlu0 %818
  %820 = vrot.lane.b32.xlu0 %v800, 88
  %v821 = vpop.permute.xlu0 %820
  %v829 = vadd.f32 %v675, %v809
  %v830 = vadd.f32 %v676, %v811
  %v831 = vadd.f32 %v677, %v813
  %v832 = vadd.f32 %v678, %v815
  %v833 = vadd.f32 %v679, %v817
  %v834 = vadd.f32 %v680, %v819
  %v835 = vadd.f32 %v681, %v821
  %v836 = vmul.f32 %v237, %v788
  %v837 = vmul.f32 %v239, %v790
  %v838 = vmul.f32 %v242, %v792
  %v839 = vmul.f32 %v244, %v794
  %v840 = vmul.f32 %v247, %v796
  %v841 = vmul.f32 %v249, %v798
  %v842 = vmul.f32 %v252, %v800
  %850 = vrot.lane.b32.xlu0 %v836, 88
  %v851 = vpop.permute.xlu0 %850
  %852 = vrot.lane.b32.xlu0 %v837, 88
  %v853 = vpop.permute.xlu0 %852
  %854 = vrot.lane.b32.xlu0 %v838, 88
  %v855 = vpop.permute.xlu0 %854
  %856 = vrot.lane.b32.xlu0 %v839, 88
  %v857 = vpop.permute.xlu0 %856
  %858 = vrot.lane.b32.xlu0 %v840, 88
  %v859 = vpop.permute.xlu0 %858
  %860 = vrot.lane.b32.xlu0 %v841, 88
  %v861 = vpop.permute.xlu0 %860
  %862 = vrot.lane.b32.xlu0 %v842, 88
  %v863 = vpop.permute.xlu0 %862
  %v871 = vadd.f32 %v752, %v851
  %v872 = vadd.f32 %v753, %v853
  %v873 = vadd.f32 %v754, %v855
  %v874 = vadd.f32 %v755, %v857
  %v875 = vadd.f32 %v756, %v859
  %v876 = vadd.f32 %v757, %v861
  %v877 = vadd.f32 %v758, %v863
  %v878 = vrcp.pop %v829
  %v879 = vrcp.pop %v830
  %v880 = vrcp.pop %v831
  %v881 = vrcp.pop %v832
  %v882 = vrcp.pop %v833
  %v883 = vrcp.pop %v834
  %v884 = vrcp.pop %v835
  %v885 = vmul.f32 %v871, %v878
  %v886 = vmul.f32 %v872, %v879
  %v887 = vmul.f32 %v873, %v880
  %v888 = vmul.f32 %v874, %v881
  %v889 = vmul.f32 %v875, %v882
  %v890 = vmul.f32 %v876, %v883
  %v891 = vmul.f32 %v877, %v884
  %v892 = vxor.u32 %v885, 2147483648
  %v893 = vxor.u32 %v886, 2147483648
  %v894 = vxor.u32 %v887, 2147483648
  %v895 = vxor.u32 %v888, 2147483648
  %v896 = vxor.u32 %v889, 2147483648
  %v897 = vxor.u32 %v890, 2147483648
  %v898 = vxor.u32 %v891, 2147483648
  %v899 = vmul.f32 %v892, 1.442695
  %v900 = vpow.pop %v899
  %v901 = vmul.f32 %v893, 1.442695
  %v902 = vpow.pop %v901
  %v903 = vmul.f32 %v894, 1.442695
  %v904 = vpow.pop %v903
  %v905 = vmul.f32 %v895, 1.442695
  %v906 = vpow.pop %v905
  %v907 = vmul.f32 %v896, 1.442695
  %v908 = vpow.pop %v907
  %v909 = vmul.f32 %v897, 1.442695
  %v910 = vpow.pop %v909
  %v911 = vmul.f32 %v898, 1.442695
  %v912 = vpow.pop %v911
  %v913 = vadd.f32 %v900, 1.0
  %v914 = vadd.f32 %v902, 1.0
  %v915 = vadd.f32 %v904, 1.0
  %v916 = vadd.f32 %v906, 1.0
  %v917 = vadd.f32 %v908, 1.0
  %v918 = vadd.f32 %v910, 1.0
  %v919 = vadd.f32 %v912, 1.0
  %v920 = vrcp.pop %v913
  %v921 = vmul.f32 %v913, %v920
  %v922 = vsub.f32 1.0, %v921
  %v923 = vmul.f32 %v920, %v922
  %v924 = vadd.f32 %v920, %v923
  %vm925 = vweird.f32 %v913
  %vm926 = vweird.f32 %v920
  %vm927 = vmor %vm925, %vm926
  %v928 = vsel %vm927, %v920, %v924
  %v929 = vand.u32 2147483647, %v913
  %vm930 = vcmp.eq.f32.partialorder %v929, 8.507059e+37
  %v931 = vand.u32 %v913, 2147483648
  %v932 = vor.u32 1.1754944e-38, %v931
  %v933 = vsel %vm930, %v932, %v928
  %v934 = vmul.f32 1.0, %v933
  %v935 = vrcp.pop %v914
  %v936 = vmul.f32 %v914, %v935
  %v937 = vsub.f32 1.0, %v936
  %v938 = vmul.f32 %v935, %v937
  %v939 = vadd.f32 %v935, %v938
  %vm940 = vweird.f32 %v914
  %vm941 = vweird.f32 %v935
  %vm942 = vmor %vm940, %vm941
  %v943 = vsel %vm942, %v935, %v939
  %v944 = vand.u32 2147483647, %v914
  %vm945 = vcmp.eq.f32.partialorder %v944, 8.507059e+37
  %v946 = vand.u32 %v914, 2147483648
  %v947 = vor.u32 1.1754944e-38, %v946
  %v948 = vsel %vm945, %v947, %v943
  %v949 = vmul.f32 1.0, %v948
  %v950 = vrcp.pop %v915
  %v951 = vmul.f32 %v915, %v950
  %v952 = vsub.f32 1.0, %v951
  %v953 = vmul.f32 %v950, %v952
  %v954 = vadd.f32 %v950, %v953
  %vm955 = vweird.f32 %v915
  %vm956 = vweird.f32 %v950
  %vm957 = vmor %vm955, %vm956
  %v958 = vsel %vm957, %v950, %v954
  %v959 = vand.u32 2147483647, %v915
  %vm960 = vcmp.eq.f32.partialorder %v959, 8.507059e+37
  %v961 = vand.u32 %v915, 2147483648
  %v962 = vor.u32 1.1754944e-38, %v961
  %v963 = vsel %vm960, %v962, %v958
  %v964 = vmul.f32 1.0, %v963
  %v965 = vrcp.pop %v916
  %v966 = vmul.f32 %v916, %v965
  %v967 = vsub.f32 1.0, %v966
  %v968 = vmul.f32 %v965, %v967
  %v969 = vadd.f32 %v965, %v968
  %vm970 = vweird.f32 %v916
  %vm971 = vweird.f32 %v965
  %vm972 = vmor %vm970, %vm971
  %v973 = vsel %vm972, %v965, %v969
  %v974 = vand.u32 2147483647, %v916
  %vm975 = vcmp.eq.f32.partialorder %v974, 8.507059e+37
  %v976 = vand.u32 %v916, 2147483648
  %v977 = vor.u32 1.1754944e-38, %v976
  %v978 = vsel %vm975, %v977, %v973
  %v979 = vmul.f32 1.0, %v978
  %v980 = vrcp.pop %v917
  %v981 = vmul.f32 %v917, %v980
  %v982 = vsub.f32 1.0, %v981
  %v983 = vmul.f32 %v980, %v982
  %v984 = vadd.f32 %v980, %v983
  %vm985 = vweird.f32 %v917
  %vm986 = vweird.f32 %v980
  %vm987 = vmor %vm985, %vm986
  %v988 = vsel %vm987, %v980, %v984
  %v989 = vand.u32 2147483647, %v917
  %vm990 = vcmp.eq.f32.partialorder %v989, 8.507059e+37
  %v991 = vand.u32 %v917, 2147483648
  %v992 = vor.u32 1.1754944e-38, %v991
  %v993 = vsel %vm990, %v992, %v988
  %v994 = vmul.f32 1.0, %v993
  %v995 = vrcp.pop %v918
  %v996 = vmul.f32 %v918, %v995
  %v997 = vsub.f32 1.0, %v996
  %v998 = vmul.f32 %v995, %v997
  %v999 = vadd.f32 %v995, %v998
  %vm1000 = vweird.f32 %v918
  %vm1001 = vweird.f32 %v995
  %vm1002 = vmor %vm1000, %vm1001
  %v1003 = vsel %vm1002, %v995, %v999
  %v1004 = vand.u32 2147483647, %v918
  %vm1005 = vcmp.eq.f32.partialorder %v1004, 8.507059e+37
  %v1006 = vand.u32 %v918, 2147483648
  %v1007 = vor.u32 1.1754944e-38, %v1006
  %v1008 = vsel %vm1005, %v1007, %v1003
  %v1009 = vmul.f32 1.0, %v1008
  %v1010 = vrcp.pop %v919
  %v1011 = vmul.f32 %v919, %v1010
  %v1012 = vsub.f32 1.0, %v1011
  %v1013 = vmul.f32 %v1010, %v1012
  %v1014 = vadd.f32 %v1010, %v1013
  %vm1015 = vweird.f32 %v919
  %vm1016 = vweird.f32 %v1010
  %vm1017 = vmor %vm1015, %vm1016
  %v1018 = vsel %vm1017, %v1010, %v1014
  %v1019 = vand.u32 2147483647, %v919
  %vm1020 = vcmp.eq.f32.partialorder %v1019, 8.507059e+37
  %v1021 = vand.u32 %v919, 2147483648
  %v1022 = vor.u32 1.1754944e-38, %v1021
  %v1023 = vsel %vm1020, %v1022, %v1018
  %v1024 = vmul.f32 1.0, %v1023
  %v1025 = vpack.c.bf16 %v949, %v934
  %v1026 = vpack.c.bf16 %v979, %v964
  %v1027 = vpack.c.bf16 %v1009, %v994
  %v1028 = vpack.c.bf16 %v1024, %v1024
  %v1029 = vld [vmem:[%s6] sm:$0xf]
  %v1030 = vld [vmem:[%s6 + $0x4] sm:$0xf]
  %v1031 = vld [vmem:[%s6 + $0x8] sm:$0xf]
  %v1032 = vld [vmem:[%s6 + $0xc] sm:$0xf]
  %v1033 = vld [vmem:[%s6 + $0x10] sm:$0xf]
  %v1034 = vld [vmem:[%s6 + $0x14] sm:$0xf]
  %v1035 = vld [vmem:[%s6 + $0x18] sm:$0xf]
  %v1043 = vunpack.c.l.b16 %v1029
  %v1044 = vunpack.c.l.b16 %v1030
  %v1045 = vunpack.c.l.b16 %v1031
  %v1046 = vunpack.c.l.b16 %v1032
  %v1047 = vunpack.c.l.b16 %v1033
  %v1048 = vunpack.c.l.b16 %v1034
  %v1049 = vunpack.c.l.b16 %v1035
  %v1050 = vpack.c.b16 %v1044, %v1043
  %v1051 = vpack.c.b16 %v1046, %v1045
  %v1052 = vpack.c.b16 %v1048, %v1047
  %v1053 = vpack.c.b16 %v1049, %v1049
  %v1058 = vsel %vm157, %v1025, 0
  %v1061 = vsel %vm157, %v1026, 0
  %v1064 = vsel %vm157, %v1027, 0
  %v1067 = vsel %vm157, %v1028, 0
  %vm1069 = vcmask 1043456
  %v1071 = vsel %vm1069, %v1053, 0
  %1073 = vmatpush.bf16.msra.mxu0 0
  %1074 = vmatpush.bf16.msra.mxu0 0
  %1075 = vmatpush.bf16.msra.mxu0 0
  %1076 = vmatpush.bf16.msra.mxu0 0
  %1077 = vmatpush.bf16.msra.mxu0 %v1071
  %1078 = vmatpush.bf16.msra.mxu0 %v1052
  %1079 = vmatpush.bf16.msra.mxu0 %v1051
  %1080 = vmatpush.bf16.msra.mxu0 %v1050
  %1081 = vmatmul.bf16.gmra.mxu0 %v1058
  %v1082 = vpop.f32.mrf.mxu0
  %v1083 = vadd.f32 0.0, %v1082
  %v1084 = vpop.f32.mrf.mxu0
  %v1085 = vadd.f32 0.0, %v1084
  %1086 = vmatmul.bf16.gmra.mxu0 %v1061
  %v1087 = vpop.f32.mrf.mxu0
  %v1088 = vadd.f32 0.0, %v1087
  %v1089 = vpop.f32.mrf.mxu0
  %v1090 = vadd.f32 0.0, %v1089
  %1091 = vmatmul.bf16.gmra.mxu0 %v1064
  %v1092 = vpop.f32.mrf.mxu0
  %v1093 = vadd.f32 0.0, %v1092
  %v1094 = vpop.f32.mrf.mxu0
  %v1095 = vadd.f32 0.0, %v1094
  %1096 = vmatmul.bf16.gmra.mxu0 %v1067
  %v1097 = vpop.f32.mrf.mxu0
  %v1098 = vadd.f32 0.0, %v1097
  %v1099 = vpop.f32.mrf.mxu0
  %1100 = vdwg.mxu0
  %v1101 = vld [vmem:[%s5] sm:$0xf]
  %v1102 = vld [vmem:[%s5 + $0x4] sm:$0xf]
  %v1103 = vld [vmem:[%s5 + $0x8] sm:$0xf]
  %v1104 = vld [vmem:[%s5 + $0xc] sm:$0xf]
  %v1105 = vld [vmem:[%s5 + $0x10] sm:$0xf]
  %v1106 = vld [vmem:[%s5 + $0x14] sm:$0xf]
  %v1107 = vld [vmem:[%s5 + $0x18] sm:$0xf]
  %v1108 = vld [vmem:[%s5 + $0x1c] sm:$0xf]
  %v1109 = vpack.c.bf16 %v1085, %v1083
  %v1110 = vpack.c.bf16 %v1090, %v1088
  %v1111 = vpack.c.bf16 %v1095, %v1093
  %v1112 = vpack.c.bf16 %v1098, %v1098
  %v1121 = vunpack.c.l.b16 %v1101
  %v1122 = vunpack.c.l.b16 %v1102
  %v1123 = vunpack.c.l.b16 %v1103
  %v1124 = vunpack.c.l.b16 %v1104
  %v1125 = vunpack.c.l.b16 %v1105
  %v1126 = vunpack.c.l.b16 %v1106
  %v1127 = vunpack.c.l.b16 %v1107
  %v1128 = vunpack.c.l.b16 %v1108
  %v1129 = vpack.c.b16 %v1122, %v1121
  %v1130 = vpack.c.b16 %v1124, %v1123
  %v1131 = vpack.c.b16 %v1126, %v1125
  %v1132 = vpack.c.b16 %v1128, %v1127
  %v1134 = vsel %vm157, %v1129, 0
  %v1137 = vsel %vm157, %v1130, 0
  %v1140 = vsel %vm157, %v1131, 0
  %v1143 = vsel %vm157, %v1132, 0
  %v1146 = vsel %vm1069, %v1112, 0
  %1148 = vmatpush.bf16.msra.mxu0 0
  %1149 = vmatpush.bf16.msra.mxu0 0
  %1150 = vmatpush.bf16.msra.mxu0 0
  %1151 = vmatpush.bf16.msra.mxu0 0
  %1152 = vmatpush.bf16.msra.mxu0 %v1146
  %1153 = vmatpush.bf16.msra.mxu0 %v1111
  %1154 = vmatpush.bf16.msra.mxu0 %v1110
  %1155 = vmatpush.bf16.msra.mxu0 %v1109
  %1156 = vmatmul.bf16.gmra.mxu0 %v1134
  %v1157 = vpop.f32.mrf.mxu0
  %v1158 = vadd.f32 0.0, %v1157
  %v1159 = vpop.f32.mrf.mxu0
  %v1160 = vadd.f32 0.0, %v1159
  %1161 = vmatmul.bf16.gmra.mxu0 %v1137
  %v1162 = vpop.f32.mrf.mxu0
  %v1163 = vadd.f32 0.0, %v1162
  %v1164 = vpop.f32.mrf.mxu0
  %v1165 = vadd.f32 0.0, %v1164
  %1166 = vmatmul.bf16.gmra.mxu0 %v1140
  %v1167 = vpop.f32.mrf.mxu0
  %v1168 = vadd.f32 0.0, %v1167
  %v1169 = vpop.f32.mrf.mxu0
  %v1170 = vadd.f32 0.0, %v1169
  %1171 = vmatmul.bf16.gmra.mxu0 %v1143
  %v1172 = vpop.f32.mrf.mxu0
  %v1173 = vadd.f32 0.0, %v1172
  %v1174 = vpop.f32.mrf.mxu0
  %v1175 = vadd.f32 0.0, %v1174
  %1176 = vdwg.mxu0
  %v1177 = vpack.c.bf16 %v1158, %v1158
  %v1178 = vpack.c.bf16 %v1160, %v1160
  %v1179 = vpack.c.bf16 %v1163, %v1163
  %v1180 = vpack.c.bf16 %v1165, %v1165
  %v1181 = vpack.c.bf16 %v1168, %v1168
  %v1182 = vpack.c.bf16 %v1170, %v1170
  %v1183 = vpack.c.bf16 %v1173, %v1173
  %v1184 = vpack.c.bf16 %v1175, %v1175
  %vm1185 = vcmask 519168
  %1186 = vst.msk [vmem:[%s7] sm:$0xf] %vm1185, %v1177
  %1187 = vst.msk [vmem:[%s7 + $0x4] sm:$0xf] %vm1185, %v1178
  %1188 = vst.msk [vmem:[%s7 + $0x8] sm:$0xf] %vm1185, %v1179
  %1189 = vst.msk [vmem:[%s7 + $0xc] sm:$0xf] %vm1185, %v1180
  %1190 = vst.msk [vmem:[%s7 + $0x10] sm:$0xf] %vm1185, %v1181
  %1191 = vst.msk [vmem:[%s7 + $0x14] sm:$0xf] %vm1185, %v1182
  %1192 = vst.msk [vmem:[%s7 + $0x18] sm:$0xf] %vm1185, %v1183
  %1193 = vst.msk [vmem:[%s7 + $0x1c] sm:$0xf] %vm1185, %v1184
  %s1194 = sadd.s32 %s33, 1
  %s1195 = sld [smem:[#allocation3 + %s1194]]
  %s1196 = smul.u32 %s1195, 8
  %s1197 = smul.addr %s1196, 4
  %s1198 = scalar_lea.vmem %s1, %s1197
  %v1199 = vld [vmem:[%s1198] sm:$0xf]
  %v1200 = vld [vmem:[%s1198 + $0x4] sm:$0xf]
  %v1201 = vld [vmem:[%s1198 + $0x8] sm:$0xf]
  %v1202 = vld [vmem:[%s1198 + $0xc] sm:$0xf]
  %v1203 = vld [vmem:[%s1198 + $0x10] sm:$0xf]
  %v1204 = vld [vmem:[%s1198 + $0x14] sm:$0xf]
  %v1205 = vld [vmem:[%s1198 + $0x18] sm:$0xf]
  %v1206 = vld [vmem:[%s1198 + $0x1c] sm:$0xf]
  %s1207 = scalar_lea.vmem %s2, 28
  %v1208 = vld [vmem:[%s1207] sm:$0xf]
  %v1209 = vld [vmem:[%s1207 + $0x4] sm:$0xf]
  %v1210 = vld [vmem:[%s1207 + $0x8] sm:$0xf]
  %v1211 = vld [vmem:[%s1207 + $0xc] sm:$0xf]
  %v1212 = vld [vmem:[%s1207 + $0x10] sm:$0xf]
  %v1213 = vld [vmem:[%s1207 + $0x14] sm:$0xf]
  %v1214 = vld [vmem:[%s1207 + $0x18] sm:$0xf]
  %s1215 = scalar_lea.vmem %s3, 8
  %v1216 = vld [vmem:[%s1215] sm:$0xf]
  %v1217 = vld [vmem:[%s1215 + $0x4] sm:$0xf]
  %v1226 = vunpack.c.l.b16 %v1199
  %v1227 = vunpack.c.l.b16 %v1200
  %v1228 = vunpack.c.l.b16 %v1201
  %v1229 = vunpack.c.l.b16 %v1202
  %v1230 = vunpack.c.l.b16 %v1203
  %v1231 = vunpack.c.l.b16 %v1204
  %v1232 = vunpack.c.l.b16 %v1205
  %v1233 = vunpack.c.l.b16 %v1206
  %v1234 = vpack.c.b16 %v1227, %v1226
  %v1235 = vpack.c.b16 %v1229, %v1228
  %v1236 = vpack.c.b16 %v1231, %v1230
  %v1237 = vpack.c.b16 %v1233, %v1232
  %v1240 = vunpack.c.l.b16 %v1216
  %v1241 = vunpack.c.l.b16 %v1217
  %v1242 = vpack.c.b16 %v1241, %v1240
  %v1245 = vsel %vm81, %v1234, 0
  %v1248 = vsel %vm81, %v1235, 0
  %v1251 = vsel %vm81, %v1236, 0
  %v1254 = vsel %vm81, %v1237, 0
  %1256 = vmatpush.bf16.msra.mxu0 0
  %1257 = vmatpush.bf16.msra.mxu0 0
  %1258 = vmatpush.bf16.msra.mxu0 0
  %1259 = vmatpush.bf16.msra.mxu0 0
  %1260 = vmatpush.bf16.msra.mxu0 0
  %1261 = vmatpush.bf16.msra.mxu0 0
  %1262 = vmatpush.bf16.msra.mxu0 0
  %1263 = vmatpush.bf16.msra.mxu0 %v1242
  %1264 = vmatmul.bf16.gmra.mxu0 %v1245
  %v1265 = vpop.f32.mrf.mxu0
  %v1266 = vadd.f32 0.0, %v1265
  %v1267 = vpop.f32.mrf.mxu0
  %v1268 = vadd.f32 0.0, %v1267
  %1269 = vmatmul.bf16.gmra.mxu0 %v1248
  %v1270 = vpop.f32.mrf.mxu0
  %v1271 = vadd.f32 0.0, %v1270
  %v1272 = vpop.f32.mrf.mxu0
  %v1273 = vadd.f32 0.0, %v1272
  %1274 = vmatmul.bf16.gmra.mxu0 %v1251
  %v1275 = vpop.f32.mrf.mxu0
  %v1276 = vadd.f32 0.0, %v1275
  %v1277 = vpop.f32.mrf.mxu0
  %v1278 = vadd.f32 0.0, %v1277
  %1279 = vmatmul.bf16.gmra.mxu0 %v1254
  %v1280 = vpop.f32.mrf.mxu0
  %v1281 = vadd.f32 0.0, %v1280
  %v1282 = vpop.f32.mrf.mxu0
  %v1283 = vadd.f32 0.0, %v1282
  %1284 = vdwg.mxu0
  %v1285 = vpack.c.bf16 %v1266, %v1266
  %v1286 = vpack.c.bf16 %v1268, %v1268
  %v1287 = vpack.c.bf16 %v1271, %v1271
  %v1288 = vpack.c.bf16 %v1273, %v1273
  %v1289 = vpack.c.bf16 %v1276, %v1276
  %v1290 = vpack.c.bf16 %v1278, %v1278
  %v1291 = vpack.c.bf16 %v1281, %v1281
  %v1292 = vpack.c.bf16 %v1283, %v1283
  %v1295 = vunpack.c.l.b16 %v1285
  %v1296 = vunpack.c.l.b16 %v1286
  %v1297 = vpack.c.b16 %v1296, %v1295
  %v1300 = vunpack.c.l.b16 %v1287
  %v1301 = vunpack.c.l.b16 %v1288
  %v1302 = vpack.c.b16 %v1301, %v1300
  %1303 = vrot.lane.b32.xlu0 %v1302, 56
  %v1304 = vpop.permute.xlu0 %1303
  %v1307 = vunpack.c.l.b16 %v1289
  %v1308 = vunpack.c.l.b16 %v1290
  %v1309 = vpack.c.b16 %v1308, %v1307
  %1310 = vrot.lane.b32.xlu0 %v1309, 112
  %v1311 = vpop.permute.xlu0 %1310
  %v1314 = vunpack.c.l.b16 %v1291
  %v1315 = vunpack.c.l.b16 %v1292
  %v1316 = vpack.c.b16 %v1315, %v1314
  %1317 = vrot.lane.b32.xlu0 %v1316, 40
  %v1318 = vpop.permute.xlu0 %1317
  %v1321 = vsel %vm157, %v1297, %v1304
  %v1323 = vsel %vm161, %v1321, %v1311
  %v1326 = vsel %vm165, %v1311, %v1318
  %v1335 = vunpack.c.l.b16 %v1208
  %v1336 = vunpack.c.l.b16 %v1209
  %v1337 = vunpack.c.l.b16 %v1210
  %v1338 = vunpack.c.l.b16 %v1211
  %v1339 = vunpack.c.l.b16 %v1212
  %v1340 = vunpack.c.l.b16 %v1213
  %v1341 = vunpack.c.l.b16 %v1214
  %v1342 = vpack.c.b16 %v1336, %v1335
  %v1343 = vpack.c.b16 %v1338, %v1337
  %v1344 = vpack.c.b16 %v1340, %v1339
  %v1345 = vpack.c.b16 %v1341, %v1341
  %v1347 = vsel %vm81, %v1342, 0
  %v1350 = vsel %vm81, %v1343, 0
  %v1353 = vsel %vm81, %v1344, 0
  %v1356 = vsel %vm81, %v1345, 0
  %1358 = vmatpush.bf16.msra.mxu0 0
  %1359 = vmatpush.bf16.msra.mxu0 0
  %1360 = vmatpush.bf16.msra.mxu0 0
  %1361 = vmatpush.bf16.msra.mxu0 0
  %1362 = vmatpush.bf16.msra.mxu0 0
  %1363 = vmatpush.bf16.msra.mxu0 0
  %1364 = vmatpush.bf16.msra.mxu0 0
  %1365 = vmatpush.bf16.msra.mxu0 %v1323
  %1366 = vmatmul.bf16.gmra.mxu0 %v1347
  %v1367 = vpop.f32.mrf.mxu0
  %v1368 = vadd.f32 0.0, %v1367
  %v1369 = vpop.f32.mrf.mxu0
  %v1370 = vadd.f32 0.0, %v1369
  %1371 = vmatmul.bf16.gmra.mxu0 %v1350
  %v1372 = vpop.f32.mrf.mxu0
  %v1373 = vadd.f32 0.0, %v1372
  %v1374 = vpop.f32.mrf.mxu0
  %v1375 = vadd.f32 0.0, %v1374
  %1376 = vmatmul.bf16.gmra.mxu0 %v1353
  %v1377 = vpop.f32.mrf.mxu0
  %v1378 = vadd.f32 0.0, %v1377
  %v1379 = vpop.f32.mrf.mxu0
  %v1380 = vadd.f32 0.0, %v1379
  %1381 = vmatmul.bf16.gmra.mxu0 %v1356
  %v1382 = vpop.f32.mrf.mxu0
  %v1383 = vadd.f32 0.0, %v1382
  %v1384 = vpop.f32.mrf.mxu0
  %1385 = vdwg.mxu0
  %1386 = vmatpush.bf16.msra.mxu0 0
  %1387 = vmatpush.bf16.msra.mxu0 0
  %1388 = vmatpush.bf16.msra.mxu0 0
  %1389 = vmatpush.bf16.msra.mxu0 0
  %1390 = vmatpush.bf16.msra.mxu0 0
  %1391 = vmatpush.bf16.msra.mxu0 0
  %1392 = vmatpush.bf16.msra.mxu0 0
  %1393 = vmatpush.bf16.msra.mxu0 %v1326
  %1394 = vmatmul.bf16.gmra.mxu0 %v1347
  %v1395 = vpop.f32.mrf.mxu0
  %v1396 = vadd.f32 0.0, %v1395
  %v1397 = vpop.f32.mrf.mxu0
  %v1398 = vadd.f32 0.0, %v1397
  %1399 = vmatmul.bf16.gmra.mxu0 %v1350
  %v1400 = vpop.f32.mrf.mxu0
  %v1401 = vadd.f32 0.0, %v1400
  %v1402 = vpop.f32.mrf.mxu0
  %v1403 = vadd.f32 0.0, %v1402
  %1404 = vmatmul.bf16.gmra.mxu0 %v1353
  %v1405 = vpop.f32.mrf.mxu0
  %v1406 = vadd.f32 0.0, %v1405
  %v1407 = vpop.f32.mrf.mxu0
  %v1408 = vadd.f32 0.0, %v1407
  %1409 = vmatmul.bf16.gmra.mxu0 %v1356
  %v1410 = vpop.f32.mrf.mxu0
  %v1411 = vadd.f32 0.0, %v1410
  %v1412 = vpop.f32.mrf.mxu0
  %1413 = vdwg.mxu0
  %s1414 = scalar_lea.vmem %s4, 112
  %v1415 = vld [vmem:[%s1414] sm:$0xff]
  %v1416 = vld [vmem:[%s1414 + $0x8] sm:$0xff]
  %v1417 = vld [vmem:[%s1414 + $0x10] sm:$0xff]
  %v1418 = vld [vmem:[%s1414 + $0x18] sm:$0xff]
  %v1419 = vld [vmem:[%s1414 + $0x20] sm:$0xff]
  %v1420 = vld [vmem:[%s1414 + $0x28] sm:$0xff]
  %v1421 = vld [vmem:[%s1414 + $0x30] sm:$0xff]
  %v1422 = vld [vmem:[%s1414 + $0x38] sm:$0xff]
  %v1423 = vld [vmem:[%s1414 + $0x40] sm:$0xff]
  %v1424 = vld [vmem:[%s1414 + $0x48] sm:$0xff]
  %v1425 = vld [vmem:[%s1414 + $0x50] sm:$0xff]
  %v1426 = vld [vmem:[%s1414 + $0x58] sm:$0xff]
  %v1427 = vld [vmem:[%s1414 + $0x60] sm:$0xff]
  %v1428 = vld [vmem:[%s1414 + $0x68] sm:$0xff]
  %1436 = vrot.lane.b32.xlu0 %v1415, 72
  %v1437 = vpop.permute.xlu0 %1436
  %1438 = vrot.lane.b32.xlu0 %v1417, 72
  %v1439 = vpop.permute.xlu0 %1438
  %1440 = vrot.lane.b32.xlu0 %v1419, 72
  %v1441 = vpop.permute.xlu0 %1440
  %1442 = vrot.lane.b32.xlu0 %v1421, 72
  %v1443 = vpop.permute.xlu0 %1442
  %1444 = vrot.lane.b32.xlu0 %v1423, 72
  %v1445 = vpop.permute.xlu0 %1444
  %1446 = vrot.lane.b32.xlu0 %v1425, 72
  %v1447 = vpop.permute.xlu0 %1446
  %1448 = vrot.lane.b32.xlu0 %v1427, 72
  %v1449 = vpop.permute.xlu0 %1448
  %v1457 = vmax.f32 %v1415, %v1437
  %v1458 = vmax.f32 %v1417, %v1439
  %v1459 = vmax.f32 %v1419, %v1441
  %v1460 = vmax.f32 %v1421, %v1443
  %v1461 = vmax.f32 %v1423, %v1445
  %v1462 = vmax.f32 %v1425, %v1447
  %v1463 = vmax.f32 %v1427, %v1449
  %1471 = vrot.lane.b32.xlu0 %v1415, 16
  %v1472 = vpop.permute.xlu0 %1471
  %1473 = vrot.lane.b32.xlu0 %v1416, 16
  %v1474 = vpop.permute.xlu0 %1473
  %1475 = vrot.lane.b32.xlu0 %v1417, 16
  %v1476 = vpop.permute.xlu0 %1475
  %1477 = vrot.lane.b32.xlu0 %v1418, 16
  %v1478 = vpop.permute.xlu0 %1477
  %1479 = vrot.lane.b32.xlu0 %v1419, 16
  %v1480 = vpop.permute.xlu0 %1479
  %1481 = vrot.lane.b32.xlu0 %v1420, 16
  %v1482 = vpop.permute.xlu0 %1481
  %1483 = vrot.lane.b32.xlu0 %v1421, 16
  %v1484 = vpop.permute.xlu0 %1483
  %1485 = vrot.lane.b32.xlu0 %v1422, 16
  %v1486 = vpop.permute.xlu0 %1485
  %1487 = vrot.lane.b32.xlu0 %v1423, 16
  %v1488 = vpop.permute.xlu0 %1487
  %1489 = vrot.lane.b32.xlu0 %v1424, 16
  %v1490 = vpop.permute.xlu0 %1489
  %1491 = vrot.lane.b32.xlu0 %v1425, 16
  %v1492 = vpop.permute.xlu0 %1491
  %1493 = vrot.lane.b32.xlu0 %v1426, 16
  %v1494 = vpop.permute.xlu0 %1493
  %1495 = vrot.lane.b32.xlu0 %v1427, 16
  %v1496 = vpop.permute.xlu0 %1495
  %1497 = vrot.lane.b32.xlu0 %v1428, 16
  %v1498 = vpop.permute.xlu0 %1497
  %v1499 = vsel %vm81, %v1472, %v1474
  %v1500 = vsel %vm81, %v1476, %v1478
  %v1501 = vsel %vm81, %v1480, %v1482
  %v1502 = vsel %vm81, %v1484, %v1486
  %v1503 = vsel %vm81, %v1488, %v1490
  %v1504 = vsel %vm81, %v1492, %v1494
  %v1505 = vsel %vm81, %v1496, %v1498
  %v1513 = vmax.f32 %v1457, %v1499
  %v1514 = vmax.f32 %v1458, %v1500
  %v1515 = vmax.f32 %v1459, %v1501
  %v1516 = vmax.f32 %v1460, %v1502
  %v1517 = vmax.f32 %v1461, %v1503
  %v1518 = vmax.f32 %v1462, %v1504
  %v1519 = vmax.f32 %v1463, %v1505
  %1520 = vrot.lane.b32.xlu0 %v1416, 88
  %v1521 = vpop.permute.xlu0 %1520
  %1522 = vrot.lane.b32.xlu0 %v1418, 88
  %v1523 = vpop.permute.xlu0 %1522
  %1524 = vrot.lane.b32.xlu0 %v1420, 88
  %v1525 = vpop.permute.xlu0 %1524
  %1526 = vrot.lane.b32.xlu0 %v1422, 88
  %v1527 = vpop.permute.xlu0 %1526
  %1528 = vrot.lane.b32.xlu0 %v1424, 88
  %v1529 = vpop.permute.xlu0 %1528
  %1530 = vrot.lane.b32.xlu0 %v1426, 88
  %v1531 = vpop.permute.xlu0 %1530
  %1532 = vrot.lane.b32.xlu0 %v1428, 88
  %v1533 = vpop.permute.xlu0 %1532
  %v1541 = vmax.f32 %v1513, %v1521
  %v1542 = vmax.f32 %v1514, %v1523
  %v1543 = vmax.f32 %v1515, %v1525
  %v1544 = vmax.f32 %v1516, %v1527
  %v1545 = vmax.f32 %v1517, %v1529
  %v1546 = vmax.f32 %v1518, %v1531
  %v1547 = vmax.f32 %v1519, %v1533
  %v1548 = vsub.f32 %v1415, %v1541
  %v1549 = vsub.f32 %v1417, %v1542
  %v1550 = vsub.f32 %v1419, %v1543
  %v1551 = vsub.f32 %v1421, %v1544
  %v1552 = vsub.f32 %v1423, %v1545
  %v1553 = vsub.f32 %v1425, %v1546
  %v1554 = vsub.f32 %v1427, %v1547
  %v1555 = vmul.f32 %v1548, 1.442695
  %v1556 = vpow.pop %v1555
  %v1557 = vmul.f32 %v1549, 1.442695
  %v1558 = vpow.pop %v1557
  %v1559 = vmul.f32 %v1550, 1.442695
  %v1560 = vpow.pop %v1559
  %v1561 = vmul.f32 %v1551, 1.442695
  %v1562 = vpow.pop %v1561
  %v1563 = vmul.f32 %v1552, 1.442695
  %v1564 = vpow.pop %v1563
  %v1565 = vmul.f32 %v1553, 1.442695
  %v1566 = vpow.pop %v1565
  %v1567 = vmul.f32 %v1554, 1.442695
  %v1568 = vpow.pop %v1567
  %v1569 = vadd.f32 %v1556, 0.0
  %v1570 = vadd.f32 %v1558, 0.0
  %v1571 = vadd.f32 %v1560, 0.0
  %v1572 = vadd.f32 %v1562, 0.0
  %v1573 = vadd.f32 %v1564, 0.0
  %v1574 = vadd.f32 %v1566, 0.0
  %v1575 = vadd.f32 %v1568, 0.0
  %v1576 = vmul.f32 %v1368, %v1556
  %v1577 = vmul.f32 %v1370, %v1558
  %v1578 = vmul.f32 %v1373, %v1560
  %v1579 = vmul.f32 %v1375, %v1562
  %v1580 = vmul.f32 %v1378, %v1564
  %v1581 = vmul.f32 %v1380, %v1566
  %v1582 = vmul.f32 %v1383, %v1568
  %v1583 = vadd.f32 %v1576, 0.0
  %v1584 = vadd.f32 %v1577, 0.0
  %v1585 = vadd.f32 %v1578, 0.0
  %v1586 = vadd.f32 %v1579, 0.0
  %v1587 = vadd.f32 %v1580, 0.0
  %v1588 = vadd.f32 %v1581, 0.0
  %v1589 = vadd.f32 %v1582, 0.0
  %1597 = vrot.lane.b32.xlu0 %v1541, 56
  %v1598 = vpop.permute.xlu0 %1597
  %1599 = vrot.lane.b32.xlu0 %v1542, 56
  %v1600 = vpop.permute.xlu0 %1599
  %1601 = vrot.lane.b32.xlu0 %v1543, 56
  %v1602 = vpop.permute.xlu0 %1601
  %1603 = vrot.lane.b32.xlu0 %v1544, 56
  %v1604 = vpop.permute.xlu0 %1603
  %1605 = vrot.lane.b32.xlu0 %v1545, 56
  %v1606 = vpop.permute.xlu0 %1605
  %1607 = vrot.lane.b32.xlu0 %v1546, 56
  %v1608 = vpop.permute.xlu0 %1607
  %1609 = vrot.lane.b32.xlu0 %v1547, 56
  %v1610 = vpop.permute.xlu0 %1609
  %v1618 = vsub.f32 %v1415, %v1598
  %v1619 = vsub.f32 %v1417, %v1600
  %v1620 = vsub.f32 %v1419, %v1602
  %v1621 = vsub.f32 %v1421, %v1604
  %v1622 = vsub.f32 %v1423, %v1606
  %v1623 = vsub.f32 %v1425, %v1608
  %v1624 = vsub.f32 %v1427, %v1610
  %v1625 = vmul.f32 %v1618, 1.442695
  %v1626 = vpow.pop %v1625
  %v1627 = vmul.f32 %v1619, 1.442695
  %v1628 = vpow.pop %v1627
  %v1629 = vmul.f32 %v1620, 1.442695
  %v1630 = vpow.pop %v1629
  %v1631 = vmul.f32 %v1621, 1.442695
  %v1632 = vpow.pop %v1631
  %v1633 = vmul.f32 %v1622, 1.442695
  %v1634 = vpow.pop %v1633
  %v1635 = vmul.f32 %v1623, 1.442695
  %v1636 = vpow.pop %v1635
  %v1637 = vmul.f32 %v1624, 1.442695
  %v1638 = vpow.pop %v1637
  %1646 = vrot.lane.b32.xlu0 %v1626, 72
  %v1647 = vpop.permute.xlu0 %1646
  %1648 = vrot.lane.b32.xlu0 %v1628, 72
  %v1649 = vpop.permute.xlu0 %1648
  %1650 = vrot.lane.b32.xlu0 %v1630, 72
  %v1651 = vpop.permute.xlu0 %1650
  %1652 = vrot.lane.b32.xlu0 %v1632, 72
  %v1653 = vpop.permute.xlu0 %1652
  %1654 = vrot.lane.b32.xlu0 %v1634, 72
  %v1655 = vpop.permute.xlu0 %1654
  %1656 = vrot.lane.b32.xlu0 %v1636, 72
  %v1657 = vpop.permute.xlu0 %1656
  %1658 = vrot.lane.b32.xlu0 %v1638, 72
  %v1659 = vpop.permute.xlu0 %1658
  %v1667 = vadd.f32 %v1569, %v1647
  %v1668 = vadd.f32 %v1570, %v1649
  %v1669 = vadd.f32 %v1571, %v1651
  %v1670 = vadd.f32 %v1572, %v1653
  %v1671 = vadd.f32 %v1573, %v1655
  %v1672 = vadd.f32 %v1574, %v1657
  %v1673 = vadd.f32 %v1575, %v1659
  %v1674 = vmul.f32 %v1368, %v1626
  %v1675 = vmul.f32 %v1370, %v1628
  %v1676 = vmul.f32 %v1373, %v1630
  %v1677 = vmul.f32 %v1375, %v1632
  %v1678 = vmul.f32 %v1378, %v1634
  %v1679 = vmul.f32 %v1380, %v1636
  %v1680 = vmul.f32 %v1383, %v1638
  %1688 = vrot.lane.b32.xlu0 %v1674, 72
  %v1689 = vpop.permute.xlu0 %1688
  %1690 = vrot.lane.b32.xlu0 %v1675, 72
  %v1691 = vpop.permute.xlu0 %1690
  %1692 = vrot.lane.b32.xlu0 %v1676, 72
  %v1693 = vpop.permute.xlu0 %1692
  %1694 = vrot.lane.b32.xlu0 %v1677, 72
  %v1695 = vpop.permute.xlu0 %1694
  %1696 = vrot.lane.b32.xlu0 %v1678, 72
  %v1697 = vpop.permute.xlu0 %1696
  %1698 = vrot.lane.b32.xlu0 %v1679, 72
  %v1699 = vpop.permute.xlu0 %1698
  %1700 = vrot.lane.b32.xlu0 %v1680, 72
  %v1701 = vpop.permute.xlu0 %1700
  %v1709 = vadd.f32 %v1583, %v1689
  %v1710 = vadd.f32 %v1584, %v1691
  %v1711 = vadd.f32 %v1585, %v1693
  %v1712 = vadd.f32 %v1586, %v1695
  %v1713 = vadd.f32 %v1587, %v1697
  %v1714 = vadd.f32 %v1588, %v1699
  %v1715 = vadd.f32 %v1589, %v1701
  %1716 = vrot.lane.b32.xlu0 %v1541, 112
  %v1717 = vpop.permute.xlu0 %1716
  %1718 = vrot.lane.b32.xlu0 %v1542, 112
  %v1719 = vpop.permute.xlu0 %1718
  %1720 = vrot.lane.b32.xlu0 %v1543, 112
  %v1721 = vpop.permute.xlu0 %1720
  %1722 = vrot.lane.b32.xlu0 %v1544, 112
  %v1723 = vpop.permute.xlu0 %1722
  %1724 = vrot.lane.b32.xlu0 %v1545, 112
  %v1725 = vpop.permute.xlu0 %1724
  %1726 = vrot.lane.b32.xlu0 %v1546, 112
  %v1727 = vpop.permute.xlu0 %1726
  %1728 = vrot.lane.b32.xlu0 %v1547, 112
  %v1729 = vpop.permute.xlu0 %1728
  %v1737 = vsub.f32 %v1415, %v1717
  %v1738 = vsub.f32 %v1416, %v1717
  %v1739 = vsub.f32 %v1417, %v1719
  %v1740 = vsub.f32 %v1418, %v1719
  %v1741 = vsub.f32 %v1419, %v1721
  %v1742 = vsub.f32 %v1420, %v1721
  %v1743 = vsub.f32 %v1421, %v1723
  %v1744 = vsub.f32 %v1422, %v1723
  %v1745 = vsub.f32 %v1423, %v1725
  %v1746 = vsub.f32 %v1424, %v1725
  %v1747 = vsub.f32 %v1425, %v1727
  %v1748 = vsub.f32 %v1426, %v1727
  %v1749 = vsub.f32 %v1427, %v1729
  %v1750 = vsub.f32 %v1428, %v1729
  %v1751 = vmul.f32 %v1737, 1.442695
  %v1752 = vpow.pop %v1751
  %v1753 = vmul.f32 %v1738, 1.442695
  %v1754 = vpow.pop %v1753
  %v1755 = vmul.f32 %v1739, 1.442695
  %v1756 = vpow.pop %v1755
  %v1757 = vmul.f32 %v1740, 1.442695
  %v1758 = vpow.pop %v1757
  %v1759 = vmul.f32 %v1741, 1.442695
  %v1760 = vpow.pop %v1759
  %v1761 = vmul.f32 %v1742, 1.442695
  %v1762 = vpow.pop %v1761
  %v1763 = vmul.f32 %v1743, 1.442695
  %v1764 = vpow.pop %v1763
  %v1765 = vmul.f32 %v1744, 1.442695
  %v1766 = vpow.pop %v1765
  %v1767 = vmul.f32 %v1745, 1.442695
  %v1768 = vpow.pop %v1767
  %v1769 = vmul.f32 %v1746, 1.442695
  %v1770 = vpow.pop %v1769
  %v1771 = vmul.f32 %v1747, 1.442695
  %v1772 = vpow.pop %v1771
  %v1773 = vmul.f32 %v1748, 1.442695
  %v1774 = vpow.pop %v1773
  %v1775 = vmul.f32 %v1749, 1.442695
  %v1776 = vpow.pop %v1775
  %v1777 = vmul.f32 %v1750, 1.442695
  %v1778 = vpow.pop %v1777
  %1793 = vrot.lane.b32.xlu0 %v1752, 16
  %v1794 = vpop.permute.xlu0 %1793
  %1795 = vrot.lane.b32.xlu0 %v1754, 16
  %v1796 = vpop.permute.xlu0 %1795
  %1797 = vrot.lane.b32.xlu0 %v1756, 16
  %v1798 = vpop.permute.xlu0 %1797
  %1799 = vrot.lane.b32.xlu0 %v1758, 16
  %v1800 = vpop.permute.xlu0 %1799
  %1801 = vrot.lane.b32.xlu0 %v1760, 16
  %v1802 = vpop.permute.xlu0 %1801
  %1803 = vrot.lane.b32.xlu0 %v1762, 16
  %v1804 = vpop.permute.xlu0 %1803
  %1805 = vrot.lane.b32.xlu0 %v1764, 16
  %v1806 = vpop.permute.xlu0 %1805
  %1807 = vrot.lane.b32.xlu0 %v1766, 16
  %v1808 = vpop.permute.xlu0 %1807
  %1809 = vrot.lane.b32.xlu0 %v1768, 16
  %v1810 = vpop.permute.xlu0 %1809
  %1811 = vrot.lane.b32.xlu0 %v1770, 16
  %v1812 = vpop.permute.xlu0 %1811
  %1813 = vrot.lane.b32.xlu0 %v1772, 16
  %v1814 = vpop.permute.xlu0 %1813
  %1815 = vrot.lane.b32.xlu0 %v1774, 16
  %v1816 = vpop.permute.xlu0 %1815
  %1817 = vrot.lane.b32.xlu0 %v1776, 16
  %v1818 = vpop.permute.xlu0 %1817
  %1819 = vrot.lane.b32.xlu0 %v1778, 16
  %v1820 = vpop.permute.xlu0 %1819
  %v1821 = vsel %vm81, %v1794, %v1796
  %v1822 = vsel %vm81, %v1798, %v1800
  %v1823 = vsel %vm81, %v1802, %v1804
  %v1824 = vsel %vm81, %v1806, %v1808
  %v1825 = vsel %vm81, %v1810, %v1812
  %v1826 = vsel %vm81, %v1814, %v1816
  %v1827 = vsel %vm81, %v1818, %v1820
  %v1835 = vadd.f32 %v1667, %v1821
  %v1836 = vadd.f32 %v1668, %v1822
  %v1837 = vadd.f32 %v1669, %v1823
  %v1838 = vadd.f32 %v1670, %v1824
  %v1839 = vadd.f32 %v1671, %v1825
  %v1840 = vadd.f32 %v1672, %v1826
  %v1841 = vadd.f32 %v1673, %v1827
  %v1842 = vmul.f32 %v1368, %v1752
  %v1843 = vmul.f32 %v1396, %v1754
  %v1844 = vmul.f32 %v1370, %v1756
  %v1845 = vmul.f32 %v1398, %v1758
  %v1846 = vmul.f32 %v1373, %v1760
  %v1847 = vmul.f32 %v1401, %v1762
  %v1848 = vmul.f32 %v1375, %v1764
  %v1849 = vmul.f32 %v1403, %v1766
  %v1850 = vmul.f32 %v1378, %v1768
  %v1851 = vmul.f32 %v1406, %v1770
  %v1852 = vmul.f32 %v1380, %v1772
  %v1853 = vmul.f32 %v1408, %v1774
  %v1854 = vmul.f32 %v1383, %v1776
  %v1855 = vmul.f32 %v1411, %v1778
  %1870 = vrot.lane.b32.xlu0 %v1842, 16
  %v1871 = vpop.permute.xlu0 %1870
  %1872 = vrot.lane.b32.xlu0 %v1843, 16
  %v1873 = vpop.permute.xlu0 %1872
  %1874 = vrot.lane.b32.xlu0 %v1844, 16
  %v1875 = vpop.permute.xlu0 %1874
  %1876 = vrot.lane.b32.xlu0 %v1845, 16
  %v1877 = vpop.permute.xlu0 %1876
  %1878 = vrot.lane.b32.xlu0 %v1846, 16
  %v1879 = vpop.permute.xlu0 %1878
  %1880 = vrot.lane.b32.xlu0 %v1847, 16
  %v1881 = vpop.permute.xlu0 %1880
  %1882 = vrot.lane.b32.xlu0 %v1848, 16
  %v1883 = vpop.permute.xlu0 %1882
  %1884 = vrot.lane.b32.xlu0 %v1849, 16
  %v1885 = vpop.permute.xlu0 %1884
  %1886 = vrot.lane.b32.xlu0 %v1850, 16
  %v1887 = vpop.permute.xlu0 %1886
  %1888 = vrot.lane.b32.xlu0 %v1851, 16
  %v1889 = vpop.permute.xlu0 %1888
  %1890 = vrot.lane.b32.xlu0 %v1852, 16
  %v1891 = vpop.permute.xlu0 %1890
  %1892 = vrot.lane.b32.xlu0 %v1853, 16
  %v1893 = vpop.permute.xlu0 %1892
  %1894 = vrot.lane.b32.xlu0 %v1854, 16
  %v1895 = vpop.permute.xlu0 %1894
  %1896 = vrot.lane.b32.xlu0 %v1855, 16
  %v1897 = vpop.permute.xlu0 %1896
  %v1898 = vsel %vm81, %v1871, %v1873
  %v1899 = vsel %vm81, %v1875, %v1877
  %v1900 = vsel %vm81, %v1879, %v1881
  %v1901 = vsel %vm81, %v1883, %v1885
  %v1902 = vsel %vm81, %v1887, %v1889
  %v1903 = vsel %vm81, %v1891, %v1893
  %v1904 = vsel %vm81, %v1895, %v1897
  %v1912 = vadd.f32 %v1709, %v1898
  %v1913 = vadd.f32 %v1710, %v1899
  %v1914 = vadd.f32 %v1711, %v1900
  %v1915 = vadd.f32 %v1712, %v1901
  %v1916 = vadd.f32 %v1713, %v1902
  %v1917 = vadd.f32 %v1714, %v1903
  %v1918 = vadd.f32 %v1715, %v1904
  %1919 = vrot.lane.b32.xlu0 %v1541, 40
  %v1920 = vpop.permute.xlu0 %1919
  %1921 = vrot.lane.b32.xlu0 %v1542, 40
  %v1922 = vpop.permute.xlu0 %1921
  %1923 = vrot.lane.b32.xlu0 %v1543, 40
  %v1924 = vpop.permute.xlu0 %1923
  %1925 = vrot.lane.b32.xlu0 %v1544, 40
  %v1926 = vpop.permute.xlu0 %1925
  %1927 = vrot.lane.b32.xlu0 %v1545, 40
  %v1928 = vpop.permute.xlu0 %1927
  %1929 = vrot.lane.b32.xlu0 %v1546, 40
  %v1930 = vpop.permute.xlu0 %1929
  %1931 = vrot.lane.b32.xlu0 %v1547, 40
  %v1932 = vpop.permute.xlu0 %1931
  %v1940 = vsub.f32 %v1416, %v1920
  %v1941 = vsub.f32 %v1418, %v1922
  %v1942 = vsub.f32 %v1420, %v1924
  %v1943 = vsub.f32 %v1422, %v1926
  %v1944 = vsub.f32 %v1424, %v1928
  %v1945 = vsub.f32 %v1426, %v1930
  %v1946 = vsub.f32 %v1428, %v1932
  %v1947 = vmul.f32 %v1940, 1.442695
  %v1948 = vpow.pop %v1947
  %v1949 = vmul.f32 %v1941, 1.442695
  %v1950 = vpow.pop %v1949
  %v1951 = vmul.f32 %v1942, 1.442695
  %v1952 = vpow.pop %v1951
  %v1953 = vmul.f32 %v1943, 1.442695
  %v1954 = vpow.pop %v1953
  %v1955 = vmul.f32 %v1944, 1.442695
  %v1956 = vpow.pop %v1955
  %v1957 = vmul.f32 %v1945, 1.442695
  %v1958 = vpow.pop %v1957
  %v1959 = vmul.f32 %v1946, 1.442695
  %v1960 = vpow.pop %v1959
  %1968 = vrot.lane.b32.xlu0 %v1948, 88
  %v1969 = vpop.permute.xlu0 %1968
  %1970 = vrot.lane.b32.xlu0 %v1950, 88
  %v1971 = vpop.permute.xlu0 %1970
  %1972 = vrot.lane.b32.xlu0 %v1952, 88
  %v1973 = vpop.permute.xlu0 %1972
  %1974 = vrot.lane.b32.xlu0 %v1954, 88
  %v1975 = vpop.permute.xlu0 %1974
  %1976 = vrot.lane.b32.xlu0 %v1956, 88
  %v1977 = vpop.permute.xlu0 %1976
  %1978 = vrot.lane.b32.xlu0 %v1958, 88
  %v1979 = vpop.permute.xlu0 %1978
  %1980 = vrot.lane.b32.xlu0 %v1960, 88
  %v1981 = vpop.permute.xlu0 %1980
  %v1989 = vadd.f32 %v1835, %v1969
  %v1990 = vadd.f32 %v1836, %v1971
  %v1991 = vadd.f32 %v1837, %v1973
  %v1992 = vadd.f32 %v1838, %v1975
  %v1993 = vadd.f32 %v1839, %v1977
  %v1994 = vadd.f32 %v1840, %v1979
  %v1995 = vadd.f32 %v1841, %v1981
  %v1996 = vmul.f32 %v1396, %v1948
  %v1997 = vmul.f32 %v1398, %v1950
  %v1998 = vmul.f32 %v1401, %v1952
  %v1999 = vmul.f32 %v1403, %v1954
  %v2000 = vmul.f32 %v1406, %v1956
  %v2001 = vmul.f32 %v1408, %v1958
  %v2002 = vmul.f32 %v1411, %v1960
  %2010 = vrot.lane.b32.xlu0 %v1996, 88
  %v2011 = vpop.permute.xlu0 %2010
  %2012 = vrot.lane.b32.xlu0 %v1997, 88
  %v2013 = vpop.permute.xlu0 %2012
  %2014 = vrot.lane.b32.xlu0 %v1998, 88
  %v2015 = vpop.permute.xlu0 %2014
  %2016 = vrot.lane.b32.xlu0 %v1999, 88
  %v2017 = vpop.permute.xlu0 %2016
  %2018 = vrot.lane.b32.xlu0 %v2000, 88
  %v2019 = vpop.permute.xlu0 %2018
  %2020 = vrot.lane.b32.xlu0 %v2001, 88
  %v2021 = vpop.permute.xlu0 %2020
  %2022 = vrot.lane.b32.xlu0 %v2002, 88
  %v2023 = vpop.permute.xlu0 %2022
  %v2031 = vadd.f32 %v1912, %v2011
  %v2032 = vadd.f32 %v1913, %v2013
  %v2033 = vadd.f32 %v1914, %v2015
  %v2034 = vadd.f32 %v1915, %v2017
  %v2035 = vadd.f32 %v1916, %v2019
  %v2036 = vadd.f32 %v1917, %v2021
  %v2037 = vadd.f32 %v1918, %v2023
  %v2038 = vrcp.pop %v1989
  %v2039 = vrcp.pop %v1990
  %v2040 = vrcp.pop %v1991
  %v2041 = vrcp.pop %v1992
  %v2042 = vrcp.pop %v1993
  %v2043 = vrcp.pop %v1994
  %v2044 = vrcp.pop %v1995
  %v2045 = vmul.f32 %v2031, %v2038
  %v2046 = vmul.f32 %v2032, %v2039
  %v2047 = vmul.f32 %v2033, %v2040
  %v2048 = vmul.f32 %v2034, %v2041
  %v2049 = vmul.f32 %v2035, %v2042
  %v2050 = vmul.f32 %v2036, %v2043
  %v2051 = vmul.f32 %v2037, %v2044
  %v2052 = vxor.u32 %v2045, 2147483648
  %v2053 = vxor.u32 %v2046, 2147483648
  %v2054 = vxor.u32 %v2047, 2147483648
  %v2055 = vxor.u32 %v2048, 2147483648
  %v2056 = vxor.u32 %v2049, 2147483648
  %v2057 = vxor.u32 %v2050, 2147483648
  %v2058 = vxor.u32 %v2051, 2147483648
  %v2059 = vmul.f32 %v2052, 1.442695
  %v2060 = vpow.pop %v2059
  %v2061 = vmul.f32 %v2053, 1.442695
  %v2062 = vpow.pop %v2061
  %v2063 = vmul.f32 %v2054, 1.442695
  %v2064 = vpow.pop %v2063
  %v2065 = vmul.f32 %v2055, 1.442695
  %v2066 = vpow.pop %v2065
  %v2067 = vmul.f32 %v2056, 1.442695
  %v2068 = vpow.pop %v2067
  %v2069 = vmul.f32 %v2057, 1.442695
  %v2070 = vpow.pop %v2069
  %v2071 = vmul.f32 %v2058, 1.442695
  %v2072 = vpow.pop %v2071
  %v2073 = vadd.f32 %v2060, 1.0
  %v2074 = vadd.f32 %v2062, 1.0
  %v2075 = vadd.f32 %v2064, 1.0
  %v2076 = vadd.f32 %v2066, 1.0
  %v2077 = vadd.f32 %v2068, 1.0
  %v2078 = vadd.f32 %v2070, 1.0
  %v2079 = vadd.f32 %v2072, 1.0
  %v2080 = vrcp.pop %v2073
  %v2081 = vmul.f32 %v2073, %v2080
  %v2082 = vsub.f32 1.0, %v2081
  %v2083 = vmul.f32 %v2080, %v2082
  %v2084 = vadd.f32 %v2080, %v2083
  %vm2085 = vweird.f32 %v2073
  %vm2086 = vweird.f32 %v2080
  %vm2087 = vmor %vm2085, %vm2086
  %v2088 = vsel %vm2087, %v2080, %v2084
  %v2089 = vand.u32 2147483647, %v2073
  %vm2090 = vcmp.eq.f32.partialorder %v2089, 8.507059e+37
  %v2091 = vand.u32 %v2073, 2147483648
  %v2092 = vor.u32 1.1754944e-38, %v2091
  %v2093 = vsel %vm2090, %v2092, %v2088
  %v2094 = vmul.f32 1.0, %v2093
  %v2095 = vrcp.pop %v2074
  %v2096 = vmul.f32 %v2074, %v2095
  %v2097 = vsub.f32 1.0, %v2096
  %v2098 = vmul.f32 %v2095, %v2097
  %v2099 = vadd.f32 %v2095, %v2098
  %vm2100 = vweird.f32 %v2074
  %vm2101 = vweird.f32 %v2095
  %vm2102 = vmor %vm2100, %vm2101
  %v2103 = vsel %vm2102, %v2095, %v2099
  %v2104 = vand.u32 2147483647, %v2074
  %vm2105 = vcmp.eq.f32.partialorder %v2104, 8.507059e+37
  %v2106 = vand.u32 %v2074, 2147483648
  %v2107 = vor.u32 1.1754944e-38, %v2106
  %v2108 = vsel %vm2105, %v2107, %v2103
  %v2109 = vmul.f32 1.0, %v2108
  %v2110 = vrcp.pop %v2075
  %v2111 = vmul.f32 %v2075, %v2110
  %v2112 = vsub.f32 1.0, %v2111
  %v2113 = vmul.f32 %v2110, %v2112
  %v2114 = vadd.f32 %v2110, %v2113
  %vm2115 = vweird.f32 %v2075
  %vm2116 = vweird.f32 %v2110
  %vm2117 = vmor %vm2115, %vm2116
  %v2118 = vsel %vm2117, %v2110, %v2114
  %v2119 = vand.u32 2147483647, %v2075
  %vm2120 = vcmp.eq.f32.partialorder %v2119, 8.507059e+37
  %v2121 = vand.u32 %v2075, 2147483648
  %v2122 = vor.u32 1.1754944e-38, %v2121
  %v2123 = vsel %vm2120, %v2122, %v2118
  %v2124 = vmul.f32 1.0, %v2123
  %v2125 = vrcp.pop %v2076
  %v2126 = vmul.f32 %v2076, %v2125
  %v2127 = vsub.f32 1.0, %v2126
  %v2128 = vmul.f32 %v2125, %v2127
  %v2129 = vadd.f32 %v2125, %v2128
  %vm2130 = vweird.f32 %v2076
  %vm2131 = vweird.f32 %v2125
  %vm2132 = vmor %vm2130, %vm2131
  %v2133 = vsel %vm2132, %v2125, %v2129
  %v2134 = vand.u32 2147483647, %v2076
  %vm2135 = vcmp.eq.f32.partialorder %v2134, 8.507059e+37
  %v2136 = vand.u32 %v2076, 2147483648
  %v2137 = vor.u32 1.1754944e-38, %v2136
  %v2138 = vsel %vm2135, %v2137, %v2133
  %v2139 = vmul.f32 1.0, %v2138
  %v2140 = vrcp.pop %v2077
  %v2141 = vmul.f32 %v2077, %v2140
  %v2142 = vsub.f32 1.0, %v2141
  %v2143 = vmul.f32 %v2140, %v2142
  %v2144 = vadd.f32 %v2140, %v2143
  %vm2145 = vweird.f32 %v2077
  %vm2146 = vweird.f32 %v2140
  %vm2147 = vmor %vm2145, %vm2146
  %v2148 = vsel %vm2147, %v2140, %v2144
  %v2149 = vand.u32 2147483647, %v2077
  %vm2150 = vcmp.eq.f32.partialorder %v2149, 8.507059e+37
  %v2151 = vand.u32 %v2077, 2147483648
  %v2152 = vor.u32 1.1754944e-38, %v2151
  %v2153 = vsel %vm2150, %v2152, %v2148
  %v2154 = vmul.f32 1.0, %v2153
  %v2155 = vrcp.pop %v2078
  %v2156 = vmul.f32 %v2078, %v2155
  %v2157 = vsub.f32 1.0, %v2156
  %v2158 = vmul.f32 %v2155, %v2157
  %v2159 = vadd.f32 %v2155, %v2158
  %vm2160 = vweird.f32 %v2078
  %vm2161 = vweird.f32 %v2155
  %vm2162 = vmor %vm2160, %vm2161
  %v2163 = vsel %vm2162, %v2155, %v2159
  %v2164 = vand.u32 2147483647, %v2078
  %vm2165 = vcmp.eq.f32.partialorder %v2164, 8.507059e+37
  %v2166 = vand.u32 %v2078, 2147483648
  %v2167 = vor.u32 1.1754944e-38, %v2166
  %v2168 = vsel %vm2165, %v2167, %v2163
  %v2169 = vmul.f32 1.0, %v2168
  %v2170 = vrcp.pop %v2079
  %v2171 = vmul.f32 %v2079, %v2170
  %v2172 = vsub.f32 1.0, %v2171
  %v2173 = vmul.f32 %v2170, %v2172
  %v2174 = vadd.f32 %v2170, %v2173
  %vm2175 = vweird.f32 %v2079
  %vm2176 = vweird.f32 %v2170
  %vm2177 = vmor %vm2175, %vm2176
  %v2178 = vsel %vm2177, %v2170, %v2174
  %v2179 = vand.u32 2147483647, %v2079
  %vm2180 = vcmp.eq.f32.partialorder %v2179, 8.507059e+37
  %v2181 = vand.u32 %v2079, 2147483648
  %v2182 = vor.u32 1.1754944e-38, %v2181
  %v2183 = vsel %vm2180, %v2182, %v2178
  %v2184 = vmul.f32 1.0, %v2183
  %v2185 = vpack.c.bf16 %v2109, %v2094
  %v2186 = vpack.c.bf16 %v2139, %v2124
  %v2187 = vpack.c.bf16 %v2169, %v2154
  %v2188 = vpack.c.bf16 %v2184, %v2184
  %s2189 = scalar_lea.vmem %s6, 28
  %v2190 = vld [vmem:[%s2189] sm:$0xf]
  %v2191 = vld [vmem:[%s2189 + $0x4] sm:$0xf]
  %v2192 = vld [vmem:[%s2189 + $0x8] sm:$0xf]
  %v2193 = vld [vmem:[%s2189 + $0xc] sm:$0xf]
  %v2194 = vld [vmem:[%s2189 + $0x10] sm:$0xf]
  %v2195 = vld [vmem:[%s2189 + $0x14] sm:$0xf]
  %v2196 = vld [vmem:[%s2189 + $0x18] sm:$0xf]
  %v2204 = vunpack.c.l.b16 %v2190
  %v2205 = vunpack.c.l.b16 %v2191
  %v2206 = vunpack.c.l.b16 %v2192
  %v2207 = vunpack.c.l.b16 %v2193
  %v2208 = vunpack.c.l.b16 %v2194
  %v2209 = vunpack.c.l.b16 %v2195
  %v2210 = vunpack.c.l.b16 %v2196
  %v2211 = vpack.c.b16 %v2205, %v2204
  %v2212 = vpack.c.b16 %v2207, %v2206
  %v2213 = vpack.c.b16 %v2209, %v2208
  %v2214 = vpack.c.b16 %v2210, %v2210
  %v2219 = vsel %vm157, %v2185, 0
  %v2222 = vsel %vm157, %v2186, 0
  %v2225 = vsel %vm157, %v2187, 0
  %v2228 = vsel %vm157, %v2188, 0
  %v2231 = vsel %vm1069, %v2214, 0
  %2233 = vmatpush.bf16.msra.mxu0 0
  %2234 = vmatpush.bf16.msra.mxu0 0
  %2235 = vmatpush.bf16.msra.mxu0 0
  %2236 = vmatpush.bf16.msra.mxu0 0
  %2237 = vmatpush.bf16.msra.mxu0 %v2231
  %2238 = vmatpush.bf16.msra.mxu0 %v2213
  %2239 = vmatpush.bf16.msra.mxu0 %v2212
  %2240 = vmatpush.bf16.msra.mxu0 %v2211
  %2241 = vmatmul.bf16.gmra.mxu0 %v2219
  %v2242 = vpop.f32.mrf.mxu0
  %v2243 = vadd.f32 0.0, %v2242
  %v2244 = vpop.f32.mrf.mxu0
  %v2245 = vadd.f32 0.0, %v2244
  %2246 = vmatmul.bf16.gmra.mxu0 %v2222
  %v2247 = vpop.f32.mrf.mxu0
  %v2248 = vadd.f32 0.0, %v2247
  %v2249 = vpop.f32.mrf.mxu0
  %v2250 = vadd.f32 0.0, %v2249
  %2251 = vmatmul.bf16.gmra.mxu0 %v2225
  %v2252 = vpop.f32.mrf.mxu0
  %v2253 = vadd.f32 0.0, %v2252
  %v2254 = vpop.f32.mrf.mxu0
  %v2255 = vadd.f32 0.0, %v2254
  %2256 = vmatmul.bf16.gmra.mxu0 %v2228
  %v2257 = vpop.f32.mrf.mxu0
  %v2258 = vadd.f32 0.0, %v2257
  %v2259 = vpop.f32.mrf.mxu0
  %2260 = vdwg.mxu0
  %s2261 = scalar_lea.vmem %s5, 32
  %v2262 = vld [vmem:[%s2261] sm:$0xf]
  %v2263 = vld [vmem:[%s2261 + $0x4] sm:$0xf]
  %v2264 = vld [vmem:[%s2261 + $0x8] sm:$0xf]
  %v2265 = vld [vmem:[%s2261 + $0xc] sm:$0xf]
  %v2266 = vld [vmem:[%s2261 + $0x10] sm:$0xf]
  %v2267 = vld [vmem:[%s2261 + $0x14] sm:$0xf]
  %v2268 = vld [vmem:[%s2261 + $0x18] sm:$0xf]
  %v2269 = vld [vmem:[%s2261 + $0x1c] sm:$0xf]
  %v2270 = vpack.c.bf16 %v2245, %v2243
  %v2271 = vpack.c.bf16 %v2250, %v2248
  %v2272 = vpack.c.bf16 %v2255, %v2253
  %v2273 = vpack.c.bf16 %v2258, %v2258
  %v2282 = vunpack.c.l.b16 %v2262
  %v2283 = vunpack.c.l.b16 %v2263
  %v2284 = vunpack.c.l.b16 %v2264
  %v2285 = vunpack.c.l.b16 %v2265
  %v2286 = vunpack.c.l.b16 %v2266
  %v2287 = vunpack.c.l.b16 %v2267
  %v2288 = vunpack.c.l.b16 %v2268
  %v2289 = vunpack.c.l.b16 %v2269
  %v2290 = vpack.c.b16 %v2283, %v2282
  %v2291 = vpack.c.b16 %v2285, %v2284
  %v2292 = vpack.c.b16 %v2287, %v2286
  %v2293 = vpack.c.b16 %v2289, %v2288
  %v2295 = vsel %vm157, %v2290, 0
  %v2298 = vsel %vm157, %v2291, 0
  %v2301 = vsel %vm157, %v2292, 0
  %v2304 = vsel %vm157, %v2293, 0
  %v2307 = vsel %vm1069, %v2273, 0
  %2309 = vmatpush.bf16.msra.mxu0 0
  %2310 = vmatpush.bf16.msra.mxu0 0
  %2311 = vmatpush.bf16.msra.mxu0 0
  %2312 = vmatpush.bf16.msra.mxu0 0
  %2313 = vmatpush.bf16.msra.mxu0 %v2307
  %2314 = vmatpush.bf16.msra.mxu0 %v2272
  %2315 = vmatpush.bf16.msra.mxu0 %v2271
  %2316 = vmatpush.bf16.msra.mxu0 %v2270
  %2317 = vmatmul.bf16.gmra.mxu0 %v2295
  %v2318 = vpop.f32.mrf.mxu0
  %v2319 = vadd.f32 0.0, %v2318
  %v2320 = vpop.f32.mrf.mxu0
  %v2321 = vadd.f32 0.0, %v2320
  %2322 = vmatmul.bf16.gmra.mxu0 %v2298
  %v2323 = vpop.f32.mrf.mxu0
  %v2324 = vadd.f32 0.0, %v2323
  %v2325 = vpop.f32.mrf.mxu0
  %v2326 = vadd.f32 0.0, %v2325
  %2327 = vmatmul.bf16.gmra.mxu0 %v2301
  %v2328 = vpop.f32.mrf.mxu0
  %v2329 = vadd.f32 0.0, %v2328
  %v2330 = vpop.f32.mrf.mxu0
  %v2331 = vadd.f32 0.0, %v2330
  %2332 = vmatmul.bf16.gmra.mxu0 %v2304
  %v2333 = vpop.f32.mrf.mxu0
  %v2334 = vadd.f32 0.0, %v2333
  %v2335 = vpop.f32.mrf.mxu0
  %v2336 = vadd.f32 0.0, %v2335
  %2337 = vdwg.mxu0
  %v2338 = vpack.c.bf16 %v2319, %v2319
  %v2339 = vpack.c.bf16 %v2321, %v2321
  %v2340 = vpack.c.bf16 %v2324, %v2324
  %v2341 = vpack.c.bf16 %v2326, %v2326
  %v2342 = vpack.c.bf16 %v2329, %v2329
  %v2343 = vpack.c.bf16 %v2331, %v2331
  %v2344 = vpack.c.bf16 %v2334, %v2334
  %v2345 = vpack.c.bf16 %v2336, %v2336
  %2354 = vrot.lane.b32.xlu0 %v2338, 64
  %v2355 = vpop.permute.xlu0 %2354
  %2356 = vrot.lane.b32.xlu0 %v2339, 64
  %v2357 = vpop.permute.xlu0 %2356
  %2358 = vrot.lane.b32.xlu0 %v2340, 64
  %v2359 = vpop.permute.xlu0 %2358
  %2360 = vrot.lane.b32.xlu0 %v2341, 64
  %v2361 = vpop.permute.xlu0 %2360
  %2362 = vrot.lane.b32.xlu0 %v2342, 64
  %v2363 = vpop.permute.xlu0 %2362
  %2364 = vrot.lane.b32.xlu0 %v2343, 64
  %v2365 = vpop.permute.xlu0 %2364
  %2366 = vrot.lane.b32.xlu0 %v2344, 64
  %v2367 = vpop.permute.xlu0 %2366
  %2368 = vrot.lane.b32.xlu0 %v2345, 64
  %v2369 = vpop.permute.xlu0 %2368
  %vm2378 = vcmask 1043968
  %2379 = vst.msk [vmem:[%s7] sm:$0xf] %vm2378, %v2355
  %2380 = vst.msk [vmem:[%s7 + $0x4] sm:$0xf] %vm2378, %v2357
  %2381 = vst.msk [vmem:[%s7 + $0x8] sm:$0xf] %vm2378, %v2359
  %2382 = vst.msk [vmem:[%s7 + $0xc] sm:$0xf] %vm2378, %v2361
  %2383 = vst.msk [vmem:[%s7 + $0x10] sm:$0xf] %vm2378, %v2363
  %2384 = vst.msk [vmem:[%s7 + $0x14] sm:$0xf] %vm2378, %v2365
  %2385 = vst.msk [vmem:[%s7 + $0x18] sm:$0xf] %vm2378, %v2367
  %2386 = vst.msk [vmem:[%s7 + $0x1c] sm:$0xf] %vm2378, %v2369
  // Predicated region
  $region26: #{blender_forward.1} parent=0 // pred_check
    _
  $region27: #{blender_forward.1} parent=0 // pred_check_branch
    %2388 = sbr.rel (0) target = $region29
  $region28: #{blender_forward.1} parent=0 // pred_region
    _
  $region29: #{blender_forward.1} parent=0 // pred_fallthru
    _
  // Predicated region
  $region30: #{blender_forward.1} parent=0 // pred_check
    _
  $region31: #{blender_forward.1} parent=0 // pred_check_branch
    %2390 = sbr.rel (0) target = $region33
  $region32: #{blender_forward.1} parent=0 // pred_region
    _
  $region33: #{blender_forward.1} parent=0 // pred_fallthru
    _

</llo_original>
